<compile_context>
chip_gen: v7x
topology: tpu7x:2x2x1
jax: 0.10.0
libtpu: 0.0.40
codegen_flags: <defaults>
</compile_context>

<pallas_src>
import functools

import numpy as np
import jax
import jax.numpy as jnp
from jax import lax
from jax.experimental import pallas as pl
from jax.experimental.pallas import tpu as pltpu


def _bispectral_kernel(x_ref, wr_ref, wi_ref, outr_ref, outi_ref,
                       *, TB, N, K, compute_dtype):
    # contract over the last dim of both operands (i.e. a @ b^T)
    dn = (((1,), (1,)), ((), ()))

    x = x_ref[...]            # (TB, K) real input tile, f32
    wr = wr_ref[...]          # (N, K)  real part of W, f32
    wi = wi_ref[...]          # (N, K)  imag part of W, f32

    # MXU operands (optionally bf16); accumulation is always f32.
    xc = x.astype(compute_dtype)
    wrc = wr.astype(compute_dtype)
    wic = wi.astype(compute_dtype)

    # l = linear(x, W); x is real -> l_r = x Wr^T, l_i = x Wi^T   (small MXU)
    lr = lax.dot_general(xc, wrc, dn, preferred_element_type=jnp.float32)   # (TB, N)
    li = lax.dot_general(xc, wic, dn, preferred_element_type=jnp.float32)   # (TB, N)

    # conj_term[b,i,j] = sum_k x[b,k] * conj(W[i,k] * W[j,k])
    # Built from three (TB*N, K) @ (K, N) matmuls (Karatsuba: the 4th matmul
    # t_ir is recovered from the "sum" product).  The reshapes only merge /
    # split sublane dims on 8-aligned boundaries (N % 8 == 0 is asserted in the
    # wrapper) so they are layout-preserving.
    wsum32 = wr + wi                                                          # (N, K)
    ar32 = (x[:, None, :] * wr[None, :, :]).reshape(TB * N, K)                # x*Wr
    ai32 = (x[:, None, :] * wi[None, :, :]).reshape(TB * N, K)                # x*Wi
    as32 = (x[:, None, :] * wsum32[None, :, :]).reshape(TB * N, K)            # x*(Wr+Wi)

    ar = ar32.astype(compute_dtype)
    ai = ai32.astype(compute_dtype)
    asum = as32.astype(compute_dtype)
    wsc = wsum32.astype(compute_dtype)

    p_rr = lax.dot_general(ar, wrc, dn, preferred_element_type=jnp.float32)   # t_rr
    p_ii = lax.dot_general(ai, wic, dn, preferred_element_type=jnp.float32)   # t_ii
    p_ss = lax.dot_general(asum, wsc, dn, preferred_element_type=jnp.float32) # t_rr+t_ri+t_ir+t_ii

    ctr = (p_rr - p_ii).reshape(TB, N, N)            # Re(conj_term)
    cti = (p_rr + p_ii - p_ss).reshape(TB, N, N)     # Im(conj_term) = -(t_ri + t_ir)

    # l_cross[b,i,j] = l[b,i] * l[b,j]   (complex outer product, NO conjugation)
    lr_i = lr[:, :, None]
    lr_j = lr[:, None, :]
    li_i = li[:, :, None]
    li_j = li[:, None, :]
    lcr = lr_i * lr_j - li_i * li_j
    lci = lr_i * li_j + li_i * lr_j

    # out = l_cross * conj_term  (complex elementwise product), f32 epilogue
    outr_ref[...] = lcr * ctr - lci * cti
    outi_ref[...] = lcr * cti + lci * ctr


def _vmem_bytes_estimate(tb, N, K):
    """Rough f32 VMEM bytes per grid step (double-buffered I/O + temporaries)."""
    return 4 * (4 * N * K + tb * (2 * K + 3 * N * K + 13 * N * N))


def _pick_tb(B, N, K, budget_bytes=24 << 20):
    """Largest batch tile (multiple of 8) whose per-step VMEM fits a conservative
    budget (safe on v7x's smaller VMEM; larger tiles amortize the ~0.35us/step
    grid overhead on v5e/v6e)."""
    cap = max(8, ((B + 7) // 8) * 8)
    tb = 8
    cand = 16
    while cand <= cap and _vmem_bytes_estimate(cand, N, K) <= budget_bytes:
        tb = cand
        cand += 8
    return tb


def bispectral_forward(x, w_real, w_imag, *, block_b=None,
                       compute_dtype=jnp.float32):
    """Pallas implementation of Bispectral.forward (return_inv=False).

    x:       (B, size_in)  float32 (real input, as in the torch path Cplx(x))
    w_real:  (size_out, size_in) float32
    w_imag:  (size_out, size_in) float32
    returns: (B, size_out*(size_out+1)//2) complex64
    """
    x = jnp.asarray(x, jnp.float32)
    w_real = jnp.asarray(w_real, jnp.float32)
    w_imag = jnp.asarray(w_imag, jnp.float32)

    B, K = x.shape
    N, K2 = w_real.shape
    assert K == K2
    # NOTE: the torch reference reshapes all_crosses to (-1, size_out), which is
    # only well-formed when size_in == size_out; we keep that assumption.
    assert N == K, "Bispectral reference code requires size_in == size_out"
    # Required so the in-kernel (TB, N, K) <-> (TB*N, K) reshapes are
    # layout-preserving (sublane-aligned).
    assert N % 8 == 0, "size_out must be a multiple of 8"

    if block_b is None:
        TB = _pick_tb(B, N, K)
    else:
        TB = max(8, (int(block_b) // 8) * 8)

    # Pad the batch to a multiple of TB (zero rows -> zero outputs, sliced off).
    Bp = ((B + TB - 1) // TB) * TB
    if Bp != B:
        x = jnp.pad(x, ((0, Bp - B), (0, 0)))
    grid = (pl.cdiv(Bp, TB),)

    est = _vmem_bytes_estimate(TB, N, K)
    vmem_limit = int(min(48 << 20, max(32 << 20, 2 * est)))

    kernel = functools.partial(_bispectral_kernel, TB=TB, N=N, K=K,
                               compute_dtype=compute_dtype)

    out_r, out_i = pl.pallas_call(
        kernel,
        out_shape=(jax.ShapeDtypeStruct((Bp, N, N), jnp.float32),
                   jax.ShapeDtypeStruct((Bp, N, N), jnp.float32)),
        grid=grid,
        in_specs=[
            pl.BlockSpec((TB, K), lambda b: (b, 0)),     # x batch tile
            pl.BlockSpec((N, K), lambda b: (0, 0)),      # Wr (resident)
            pl.BlockSpec((N, K), lambda b: (0, 0)),      # Wi (resident)
        ],
        out_specs=(
            pl.BlockSpec((TB, N, N), lambda b: (b, 0, 0)),
            pl.BlockSpec((TB, N, N), lambda b: (b, 0, 0)),
        ),
        compiler_params=pltpu.CompilerParams(
            dimension_semantics=("parallel",),
            vmem_limit_bytes=vmem_limit,
        ),
    )(x, w_real, w_imag)

    # TODO(synk): upper-triangular gather kept in plain JAX (irregular gather; glue).
    # Gather real/imag separately, then form complex64 only for the triangle
    # (avoids a full (B, N, N) complex64 round-trip through HBM).
    iu0, iu1 = np.triu_indices(N, k=0)
    out_r = out_r[:B, iu0, iu1]
    out_i = out_i[:B, iu0, iu1]
    return out_r + 1j * out_i                       # (B, N*(N+1)//2) complex64


def bispectral_reference_np(x, w_real, w_imag):
    """Pure-NumPy reference mirroring the torch forward exactly."""
    x = np.asarray(x).astype(np.complex64)
    W = np.asarray(w_real).astype(np.complex64) + 1j * np.asarray(w_imag).astype(np.complex64)
    N, K = W.shape
    l = x @ W.T                                                # (B, N)
    l_ = l[:, :, None]
    l_cross = np.matmul(l_, np.swapaxes(l_, 1, -1)).reshape(x.shape[0], -1)
    all_crosses = np.conj(W[:, None, :] * W[None, :, :]).reshape(-1, K)
    conj_term = x @ all_crosses.T
    out = (l_cross * conj_term).reshape(-1, N, N)
    iu = np.triu_indices(N, k=0)
    return out[:, iu[0], iu[1]]


if __name__ == "__main__":
    B, size_in, size_out = 8, 16, 16

    key = jax.random.PRNGKey(0)
    kx, kr, ki = jax.random.split(key, 3)
    x = jax.random.normal(kx, (B, size_in), dtype=jnp.float32)
    # Deterministic synthetic stand-in for cplx_trabelsi_independent_ init
    # (same shapes as Cplx.empty(size_out, size_in)).
    scale = 1.0 / np.sqrt(size_in)
    w_real = (scale * jax.random.normal(kr, (size_out, size_in))).astype(jnp.float32)
    w_imag = (scale * jax.random.normal(ki, (size_out, size_in))).astype(jnp.float32)

    ref = bispectral_reference_np(x, w_real, w_imag)
    n_tri = size_out * (size_out + 1) // 2

    # 1) f32 MXU path
    out = jax.block_until_ready(bispectral_forward(x, w_real, w_imag))
    np.testing.assert_allclose(np.asarray(out), ref, rtol=1e-4, atol=1e-4)
    assert out.shape == (B, n_tri)

    # 2) batch-padding path (B not a multiple of the batch tile)
    out5 = jax.block_until_ready(bispectral_forward(x[:5], w_real, w_imag))
    np.testing.assert_allclose(np.asarray(out5), ref[:5], rtol=1e-4, atol=1e-4)

    # 3) bf16 MXU operands + f32 accumulation / f32 epilogue (looser tolerance,
    #    checked via relative Frobenius error to be robust to cancellation).
    out_bf = jax.block_until_ready(
        bispectral_forward(x, w_real, w_imag, compute_dtype=jnp.bfloat16))
    rel_err = (np.linalg.norm(np.asarray(out_bf) - ref)
               / max(np.linalg.norm(ref), 1e-12))
    assert rel_err < 5e-2, f"bf16 relative error too large: {rel_err}"

    print("KERNEL_OK")
</pallas_src>

<mosaic_0001>
module attributes {stable_mosaic.version = 11 : i64} {
  func.func @_bispectral_kernel(%arg0: i32, %arg1: memref<8x16xf32, #tpu.memory_space<vmem>>, %arg2: memref<16x16xf32, #tpu.memory_space<vmem>>, %arg3: memref<16x16xf32, #tpu.memory_space<vmem>>, %arg4: memref<8x16x16xf32, #tpu.memory_space<vmem>>, %arg5: memref<8x16x16xf32, #tpu.memory_space<vmem>>) attributes {dimension_semantics = [#tpu.dimension_semantics<parallel>], iteration_bounds = array<i64: 1>, scalar_prefetch = 0 : i64, scratch_operands = 0 : i64, tpu.core_type = #tpu.core_type<tc>, window_params = [{transform_indices = @transform_0, window_bounds = array<i64: 8, 16>}, {pipeline_mode = #tpu.pipeline_mode<synchronous>, transform_indices = @transform_1, window_bounds = array<i64: 16, 16>}, {pipeline_mode = #tpu.pipeline_mode<synchronous>, transform_indices = @transform_2, window_bounds = array<i64: 16, 16>}, {transform_indices = @transform_3, window_bounds = array<i64: 8, 16, 16>}, {transform_indices = @transform_4, window_bounds = array<i64: 8, 16, 16>}]} {
    %c0 = arith.constant 0 : index
    %c0_0 = arith.constant 0 : index
    %0 = vector.load %arg1[%c0, %c0_0] : memref<8x16xf32, #tpu.memory_space<vmem>>, vector<8x16xf32>
    %c0_1 = arith.constant 0 : index
    %c0_2 = arith.constant 0 : index
    %1 = vector.load %arg2[%c0_1, %c0_2] : memref<16x16xf32, #tpu.memory_space<vmem>>, vector<16x16xf32>
    %c0_3 = arith.constant 0 : index
    %c0_4 = arith.constant 0 : index
    %2 = vector.load %arg3[%c0_3, %c0_4] : memref<16x16xf32, #tpu.memory_space<vmem>>, vector<16x16xf32>
    %cst = arith.constant dense<0.000000e+00> : vector<8x16xf32>
    %3 = tpu.matmul %0, %1, %cst {dimension_numbers = #tpu.dot_dimension_numbers<[1], [1], [0], [0], [0, 0, 1, 0], [], []>} : vector<8x16xf32>, vector<16x16xf32>, vector<8x16xf32> -> vector<8x16xf32>
    %cst_5 = arith.constant dense<0.000000e+00> : vector<8x16xf32>
    %4 = tpu.matmul %0, %2, %cst_5 {dimension_numbers = #tpu.dot_dimension_numbers<[1], [1], [0], [0], [0, 0, 1, 0], [], []>} : vector<8x16xf32>, vector<16x16xf32>, vector<8x16xf32> -> vector<8x16xf32>
    %5 = arith.addf %1, %2 : vector<16x16xf32>
    %6 = vector.shape_cast %0 : vector<8x16xf32> to vector<8x1x16xf32>
    %7 = vector.shape_cast %1 : vector<16x16xf32> to vector<1x16x16xf32>
    %8 = vector.broadcast %6 : vector<8x1x16xf32> to vector<8x16x16xf32>
    %9 = vector.broadcast %7 : vector<1x16x16xf32> to vector<8x16x16xf32>
    %10 = arith.mulf %8, %9 : vector<8x16x16xf32>
    %11 = vector.shape_cast %10 : vector<8x16x16xf32> to vector<128x16xf32>
    %12 = vector.shape_cast %0 : vector<8x16xf32> to vector<8x1x16xf32>
    %13 = vector.shape_cast %2 : vector<16x16xf32> to vector<1x16x16xf32>
    %14 = vector.broadcast %12 : vector<8x1x16xf32> to vector<8x16x16xf32>
    %15 = vector.broadcast %13 : vector<1x16x16xf32> to vector<8x16x16xf32>
    %16 = arith.mulf %14, %15 : vector<8x16x16xf32>
    %17 = vector.shape_cast %16 : vector<8x16x16xf32> to vector<128x16xf32>
    %18 = vector.shape_cast %0 : vector<8x16xf32> to vector<8x1x16xf32>
    %19 = vector.shape_cast %5 : vector<16x16xf32> to vector<1x16x16xf32>
    %20 = vector.broadcast %18 : vector<8x1x16xf32> to vector<8x16x16xf32>
    %21 = vector.broadcast %19 : vector<1x16x16xf32> to vector<8x16x16xf32>
    %22 = arith.mulf %20, %21 : vector<8x16x16xf32>
    %23 = vector.shape_cast %22 : vector<8x16x16xf32> to vector<128x16xf32>
    %cst_6 = arith.constant dense<0.000000e+00> : vector<128x16xf32>
    %24 = tpu.matmul %11, %1, %cst_6 {dimension_numbers = #tpu.dot_dimension_numbers<[1], [1], [0], [0], [0, 0, 1, 0], [], []>} : vector<128x16xf32>, vector<16x16xf32>, vector<128x16xf32> -> vector<128x16xf32>
    %cst_7 = arith.constant dense<0.000000e+00> : vector<128x16xf32>
    %25 = tpu.matmul %17, %2, %cst_7 {dimension_numbers = #tpu.dot_dimension_numbers<[1], [1], [0], [0], [0, 0, 1, 0], [], []>} : vector<128x16xf32>, vector<16x16xf32>, vector<128x16xf32> -> vector<128x16xf32>
    %cst_8 = arith.constant dense<0.000000e+00> : vector<128x16xf32>
    %26 = tpu.matmul %23, %5, %cst_8 {dimension_numbers = #tpu.dot_dimension_numbers<[1], [1], [0], [0], [0, 0, 1, 0], [], []>} : vector<128x16xf32>, vector<16x16xf32>, vector<128x16xf32> -> vector<128x16xf32>
    %27 = arith.subf %24, %25 : vector<128x16xf32>
    %28 = vector.shape_cast %27 : vector<128x16xf32> to vector<8x16x16xf32>
    %29 = arith.addf %24, %25 : vector<128x16xf32>
    %30 = arith.subf %29, %26 : vector<128x16xf32>
    %31 = vector.shape_cast %30 : vector<128x16xf32> to vector<8x16x16xf32>
    %32 = vector.shape_cast %3 : vector<8x16xf32> to vector<8x16x1xf32>
    %33 = vector.shape_cast %3 : vector<8x16xf32> to vector<8x1x16xf32>
    %34 = vector.shape_cast %4 : vector<8x16xf32> to vector<8x16x1xf32>
    %35 = vector.shape_cast %4 : vector<8x16xf32> to vector<8x1x16xf32>
    %36 = vector.broadcast %32 : vector<8x16x1xf32> to vector<8x16x16xf32>
    %37 = vector.broadcast %33 : vector<8x1x16xf32> to vector<8x16x16xf32>
    %38 = arith.mulf %36, %37 : vector<8x16x16xf32>
    %39 = vector.broadcast %34 : vector<8x16x1xf32> to vector<8x16x16xf32>
    %40 = vector.broadcast %35 : vector<8x1x16xf32> to vector<8x16x16xf32>
    %41 = arith.mulf %39, %40 : vector<8x16x16xf32>
    %42 = arith.subf %38, %41 : vector<8x16x16xf32>
    %43 = vector.broadcast %32 : vector<8x16x1xf32> to vector<8x16x16xf32>
    %44 = vector.broadcast %35 : vector<8x1x16xf32> to vector<8x16x16xf32>
    %45 = arith.mulf %43, %44 : vector<8x16x16xf32>
    %46 = vector.broadcast %34 : vector<8x16x1xf32> to vector<8x16x16xf32>
    %47 = vector.broadcast %33 : vector<8x1x16xf32> to vector<8x16x16xf32>
    %48 = arith.mulf %46, %47 : vector<8x16x16xf32>
    %49 = arith.addf %45, %48 : vector<8x16x16xf32>
    %50 = arith.mulf %42, %28 : vector<8x16x16xf32>
    %51 = arith.mulf %49, %31 : vector<8x16x16xf32>
    %52 = arith.subf %50, %51 : vector<8x16x16xf32>
    %c0_9 = arith.constant 0 : index
    %c0_10 = arith.constant 0 : index
    %c0_11 = arith.constant 0 : index
    %53 = vector.load %arg4[%c0_9, %c0_10, %c0_11] : memref<8x16x16xf32, #tpu.memory_space<vmem>>, vector<8x16x16xf32>
    tpu.vector_store %arg4[%c0_9, %c0_10, %c0_11], %52 {strides = array<i32>} : memref<8x16x16xf32, #tpu.memory_space<vmem>>, vector<8x16x16xf32>,
    %54 = arith.mulf %42, %31 : vector<8x16x16xf32>
    %55 = arith.mulf %49, %28 : vector<8x16x16xf32>
    %56 = arith.addf %54, %55 : vector<8x16x16xf32>
    %c0_12 = arith.constant 0 : index
    %c0_13 = arith.constant 0 : index
    %c0_14 = arith.constant 0 : index
    %57 = vector.load %arg5[%c0_12, %c0_13, %c0_14] : memref<8x16x16xf32, #tpu.memory_space<vmem>>, vector<8x16x16xf32>
    tpu.vector_store %arg5[%c0_12, %c0_13, %c0_14], %56 {strides = array<i32>} : memref<8x16x16xf32, #tpu.memory_space<vmem>>, vector<8x16x16xf32>,
    return
  }
  func.func @transform_0(%arg0: i32) -> (i32, i32) {
    %c0_i32 = arith.constant 0 : i32
    %c0_i32_0 = arith.constant 0 : i32
    return %arg0, %c0_i32 : i32, i32
  }
  func.func @transform_1(%arg0: i32) -> (i32, i32) {
    %c0_i32 = arith.constant 0 : i32
    %c0_i32_0 = arith.constant 0 : i32
    %c0_i32_1 = arith.constant 0 : i32
    return %c0_i32, %c0_i32_0 : i32, i32
  }
  func.func @transform_2(%arg0: i32) -> (i32, i32) {
    %c0_i32 = arith.constant 0 : i32
    %c0_i32_0 = arith.constant 0 : i32
    %c0_i32_1 = arith.constant 0 : i32
    return %c0_i32, %c0_i32_0 : i32, i32
  }
  func.func @transform_3(%arg0: i32) -> (i32, i32, i32) {
    %c0_i32 = arith.constant 0 : i32
    %c0_i32_0 = arith.constant 0 : i32
    %c0_i32_1 = arith.constant 0 : i32
    return %arg0, %c0_i32, %c0_i32_0 : i32, i32, i32
  }
  func.func @transform_4(%arg0: i32) -> (i32, i32, i32) {
    %c0_i32 = arith.constant 0 : i32
    %c0_i32_0 = arith.constant 0 : i32
    %c0_i32_1 = arith.constant 0 : i32
    return %arg0, %c0_i32, %c0_i32_0 : i32, i32, i32
  }
}

</mosaic_0001>

<llo_original>
// kernel: tpu_custom_call.1
$region0: #{tpu_custom_call.1}
  #allocation0 [shape = 'u32[]', space=smem, size = 0x4, offset = 0x4, fixed_abs, tag = 'smem constant byte address 0x4 - core index']
  #allocation1 [shape = 'u32[144,128]{1,0:T(1,128)}', space=vmem, size = 0x12000, scoped, tag = 'internal scratch']
  %s0 = inlined_call_operand.hbm [shape: f32[8,16], index: 0, kind: input, shape index: {}]
  %s1 = inlined_call_operand.hbm [shape: f32[16,16], index: 1, kind: input, shape index: {}]
  %s2 = inlined_call_operand.hbm [shape: f32[16,16], index: 2, kind: input, shape index: {}]
  %s3 = inlined_call_operand.hbm [shape: f32[8,16,16], index: 3, kind: output, shape index: {0}]
  %s4 = inlined_call_operand.hbm [shape: f32[8,16,16], index: 4, kind: output, shape index: {1}]
  %5 = xla_tuple %s3, %s4
  %s6 = sld [smem:[#allocation0]]
  $region42: #{tpu_custom_call.1} parent=0
    _
  %s8 = ssub.s32 1, %s6
  %s9 = scalar_select 0, %s8, %s6
  $region1: #{tpu_custom_call.1} parent=0
    #allocation2 [shape = 'u8[4096]{0}', space=vmem, size = 0x1000, scoped, tag = 'input window, operand 0, single buffered']
    #allocation3 [shape = 's32[1]{0}', space=sflag, size = 0x4, scoped, tag = 'scoped memory for tpu_custom_call.1']
    #allocation4 [shape = 's32[1]{0}', space=sflag, size = 0x4, scoped, tag = 'scoped memory for tpu_custom_call.1']
    #allocation5 [shape = 'u8[8192]{0}', space=vmem, size = 0x2000, scoped, tag = 'input window, operand 1, single buffered']
    #allocation6 [shape = 's32[1]{0}', space=sflag, size = 0x4, scoped, tag = 'scoped memory for tpu_custom_call.1']
    #allocation7 [shape = 'u8[8192]{0}', space=vmem, size = 0x2000, scoped, tag = 'input window, operand 2, single buffered']
    #allocation8 [shape = 'u8[65536]{0}', space=vmem, size = 0x10000, scoped, tag = 'output window, operand 0, single buffered']
    #allocation9 [shape = 'u8[65536]{0}', space=vmem, size = 0x10000, scoped, tag = 'output window, operand 1, single buffered']
    #allocation10 [shape = 's32[1]{0}', space=sflag, size = 0x4, scoped, tag = 'scoped memory for tpu_custom_call.1']
    %10 = vsyncpa [#allocation3], 0
    %11 = vsyncpa [#allocation6], 0
    %12 = vsyncpa [#allocation4], 0
    %13 = vsyncpa [#allocation10], 0
    // Predicated region
    $region2: #{tpu_custom_call.1} parent=1 // pred_check
      _
    $region3: #{tpu_custom_call.1} parent=1 // pred_check_branch
      %15 = sbr.rel (0) target = $region5
    $region4: #{tpu_custom_call.1} parent=1 // pred_region
      %s17 = ssub.s32 128, 128
      %18 = vsyncadd [#allocation3], %s17
      %s20 = sshll.u32 [#allocation2], 4
      %s21 = int_to_ptr.vmem [resolvable:$true] %s20
      %23 = dma.hbm_to_vmem [thread:$0]  %s0, 128, %s21, [#allocation3]
    $region5: #{tpu_custom_call.1} parent=1 // pred_fallthru
      _
    // Predicated region
    $region6: #{tpu_custom_call.1} parent=1 // pred_check
      _
    $region7: #{tpu_custom_call.1} parent=1 // pred_check_branch
      %25 = sbr.rel (0) target = $region9
    $region8: #{tpu_custom_call.1} parent=1 // pred_region
      %s27 = ssub.s32 256, 256
      %28 = vsyncadd [#allocation6], %s27
      %s29 = sshll.u32 [#allocation5], 4
      %s30 = int_to_ptr.vmem [resolvable:$true] %s29
      %35 = dma.hbm_to_vmem [thread:$0]  %s1, 256, %s30, [#allocation6], 128, 128, 8
    $region9: #{tpu_custom_call.1} parent=1 // pred_fallthru
      _
    // Predicated region
    $region10: #{tpu_custom_call.1} parent=1 // pred_check
      _
    $region11: #{tpu_custom_call.1} parent=1 // pred_check_branch
      %37 = sbr.rel (0) target = $region13
    $region12: #{tpu_custom_call.1} parent=1 // pred_region
      %s39 = ssub.s32 256, 256
      %40 = vsyncadd [#allocation6], %s39
      %s41 = sshll.u32 [#allocation7], 4
      %s42 = int_to_ptr.vmem [resolvable:$true] %s41
      %47 = dma.hbm_to_vmem [thread:$0]  %s2, 256, %s42, [#allocation6], 128, 128, 8
    $region13: #{tpu_custom_call.1} parent=1 // pred_fallthru
      _
    // Predicated region
    $region14: #{tpu_custom_call.1} parent=1 // pred_check
      _
    $region15: #{tpu_custom_call.1} parent=1 // pred_check_branch
      %49 = sbr.rel (0) target = $region17
    $region16: #{tpu_custom_call.1} parent=1 // pred_region
      %50 = dma.done [#allocation3], 128
    $region17: #{tpu_custom_call.1} parent=1 // pred_fallthru
      _
    // Predicated region
    $region18: #{tpu_custom_call.1} parent=1 // pred_check
      _
    $region19: #{tpu_custom_call.1} parent=1 // pred_check_branch
      %52 = sbr.rel (0) target = $region21
    $region20: #{tpu_custom_call.1} parent=1 // pred_region
      %53 = dma.done [#allocation6], 256
    $region21: #{tpu_custom_call.1} parent=1 // pred_fallthru
      _
    // Predicated region
    $region22: #{tpu_custom_call.1} parent=1 // pred_check
      _
    $region23: #{tpu_custom_call.1} parent=1 // pred_check_branch
      %55 = sbr.rel (0) target = $region25
    $region24: #{tpu_custom_call.1} parent=1 // pred_region
      %56 = dma.done [#allocation6], 256
    $region25: #{tpu_custom_call.1} parent=1 // pred_fallthru
      _
    %v57 = vld [vmem:[#allocation2] sm:$0xff]
    %v58 = vld [vmem:[#allocation5] sm:$0xff]
    %v59 = vld [vmem:[#allocation5 + $0x8] sm:$0xff]
    %v60 = vld [vmem:[#allocation7] sm:$0xff]
    %v61 = vld [vmem:[#allocation7 + $0x8] sm:$0xff]
    %vm62 = vcmask 130048
    %v64 = vsel %vm62, %v57, 0
    %v67 = vsel %vm62, %v58, 0
    %v70 = vsel %vm62, %v59, 0
    %72 = vmatprep.subr.mxu0 0.0
    %73 = vmatpush1.xpose.msra.mxu0 %v67
    %74 = vmatprep.subr.mxu0 0.0
    %75 = vmatpush1.xpose.msra.mxu0 %v70
    %76 = vmatprep.subr.mxu0 0.0
    %77 = vmatpush1.xpose.msra.mxu0 0.0
    %78 = vmatprep.subr.mxu0 0.0
    %79 = vmatpush1.xpose.msra.mxu0 0.0
    %80 = vmatprep.subr.mxu0 0.0
    %81 = vmatpush1.xpose.msra.mxu0 0.0
    %82 = vmatprep.subr.mxu0 0.0
    %83 = vmatpush1.xpose.msra.mxu0 0.0
    %84 = vmatprep.subr.mxu0 0.0
    %85 = vmatpush1.xpose.msra.mxu0 0.0
    %86 = vmatprep.subr.mxu0 0.0
    %87 = vmatpush1.xpose.msra.mxu0 0.0
    %88 = vmatprep.subr.mxu0 0.0
    %89 = vmatpush1.xpose.msra.mxu0 0.0
    %90 = vmatprep.subr.mxu0 0.0
    %91 = vmatpush1.xpose.msra.mxu0 0.0
    %92 = vmatprep.subr.mxu0 0.0
    %93 = vmatpush1.xpose.msra.mxu0 0.0
    %94 = vmatprep.subr.mxu0 0.0
    %95 = vmatpush1.xpose.msra.mxu0 0.0
    %96 = vmatprep.subr.mxu0 0.0
    %97 = vmatpush1.xpose.msra.mxu0 0.0
    %98 = vmatprep.subr.mxu0 0.0
    %99 = vmatpush1.xpose.msra.mxu0 0.0
    %100 = vmatprep.subr.mxu0 0.0
    %101 = vmatpush1.xpose.msra.mxu0 0.0
    %102 = vmatprep.subr.mxu0 0.0
    %103 = vmatpush1.xpose.msra.mxu0 0.0
    %104 = vmatprep.subr.mxu0 0.0
    %105 = vmatpush1.xpose.msra.mxu0 0.0
    %106 = vmatprep.subr.mxu0 0.0
    %107 = vmatpush1.xpose.msra.mxu0 0.0
    %108 = vmatprep.subr.mxu0 0.0
    %109 = vmatpush1.xpose.msra.mxu0 0.0
    %110 = vmatprep.subr.mxu0 0.0
    %111 = vmatpush1.xpose.msra.mxu0 0.0
    %112 = vmatprep.subr.mxu0 0.0
    %113 = vmatpush1.xpose.msra.mxu0 0.0
    %114 = vmatprep.subr.mxu0 0.0
    %115 = vmatpush1.xpose.msra.mxu0 0.0
    %116 = vmatprep.subr.mxu0 0.0
    %117 = vmatpush1.xpose.msra.mxu0 0.0
    %118 = vmatprep.subr.mxu0 0.0
    %119 = vmatpush1.xpose.msra.mxu0 0.0
    %120 = vmatprep.subr.mxu0 0.0
    %121 = vmatpush1.xpose.msra.mxu0 0.0
    %122 = vmatprep.subr.mxu0 0.0
    %123 = vmatpush1.xpose.msra.mxu0 0.0
    %124 = vmatprep.subr.mxu0 0.0
    %125 = vmatpush1.xpose.msra.mxu0 0.0
    %126 = vmatprep.subr.mxu0 0.0
    %127 = vmatpush1.xpose.msra.mxu0 0.0
    %128 = vmatprep.subr.mxu0 0.0
    %129 = vmatpush1.xpose.msra.mxu0 0.0
    %130 = vmatprep.subr.mxu0 0.0
    %131 = vmatpush1.xpose.msra.mxu0 0.0
    %132 = vmatprep.subr.mxu0 0.0
    %133 = vmatpush1.xpose.msra.mxu0 0.0
    %134 = vmatprep.subr.mxu0 0.0
    %135 = vmatpush1.xpose.msra.mxu0 0.0
    %136 = vmatprep.mubr.f32.mxu0 0.0
    %137 = vmatmul.mubr.f32.gmra.mrb[0].mxu0 %v64
    %v138 = vpop.f32.mrb[0].mxu0
    %v139 = vadd.f32 0.0, %v138
    %v140 = vpop.f32.mrb[0].mxu0
    %141 = vdwg.mxu0
    %v143 = vsel %vm62, %v60, 0
    %v146 = vsel %vm62, %v61, 0
    %148 = vmatprep.subr.mxu0 0.0
    %149 = vmatpush1.xpose.msra.mxu0 %v143
    %150 = vmatprep.subr.mxu0 0.0
    %151 = vmatpush1.xpose.msra.mxu0 %v146
    %152 = vmatprep.subr.mxu0 0.0
    %153 = vmatpush1.xpose.msra.mxu0 0.0
    %154 = vmatprep.subr.mxu0 0.0
    %155 = vmatpush1.xpose.msra.mxu0 0.0
    %156 = vmatprep.subr.mxu0 0.0
    %157 = vmatpush1.xpose.msra.mxu0 0.0
    %158 = vmatprep.subr.mxu0 0.0
    %159 = vmatpush1.xpose.msra.mxu0 0.0
    %160 = vmatprep.subr.mxu0 0.0
    %161 = vmatpush1.xpose.msra.mxu0 0.0
    %162 = vmatprep.subr.mxu0 0.0
    %163 = vmatpush1.xpose.msra.mxu0 0.0
    %164 = vmatprep.subr.mxu0 0.0
    %165 = vmatpush1.xpose.msra.mxu0 0.0
    %166 = vmatprep.subr.mxu0 0.0
    %167 = vmatpush1.xpose.msra.mxu0 0.0
    %168 = vmatprep.subr.mxu0 0.0
    %169 = vmatpush1.xpose.msra.mxu0 0.0
    %170 = vmatprep.subr.mxu0 0.0
    %171 = vmatpush1.xpose.msra.mxu0 0.0
    %172 = vmatprep.subr.mxu0 0.0
    %173 = vmatpush1.xpose.msra.mxu0 0.0
    %174 = vmatprep.subr.mxu0 0.0
    %175 = vmatpush1.xpose.msra.mxu0 0.0
    %176 = vmatprep.subr.mxu0 0.0
    %177 = vmatpush1.xpose.msra.mxu0 0.0
    %178 = vmatprep.subr.mxu0 0.0
    %179 = vmatpush1.xpose.msra.mxu0 0.0
    %180 = vmatprep.subr.mxu0 0.0
    %181 = vmatpush1.xpose.msra.mxu0 0.0
    %182 = vmatprep.subr.mxu0 0.0
    %183 = vmatpush1.xpose.msra.mxu0 0.0
    %184 = vmatprep.subr.mxu0 0.0
    %185 = vmatpush1.xpose.msra.mxu0 0.0
    %186 = vmatprep.subr.mxu0 0.0
    %187 = vmatpush1.xpose.msra.mxu0 0.0
    %188 = vmatprep.subr.mxu0 0.0
    %189 = vmatpush1.xpose.msra.mxu0 0.0
    %190 = vmatprep.subr.mxu0 0.0
    %191 = vmatpush1.xpose.msra.mxu0 0.0
    %192 = vmatprep.subr.mxu0 0.0
    %193 = vmatpush1.xpose.msra.mxu0 0.0
    %194 = vmatprep.subr.mxu0 0.0
    %195 = vmatpush1.xpose.msra.mxu0 0.0
    %196 = vmatprep.subr.mxu0 0.0
    %197 = vmatpush1.xpose.msra.mxu0 0.0
    %198 = vmatprep.subr.mxu0 0.0
    %199 = vmatpush1.xpose.msra.mxu0 0.0
    %200 = vmatprep.subr.mxu0 0.0
    %201 = vmatpush1.xpose.msra.mxu0 0.0
    %202 = vmatprep.subr.mxu0 0.0
    %203 = vmatpush1.xpose.msra.mxu0 0.0
    %204 = vmatprep.subr.mxu0 0.0
    %205 = vmatpush1.xpose.msra.mxu0 0.0
    %206 = vmatprep.subr.mxu0 0.0
    %207 = vmatpush1.xpose.msra.mxu0 0.0
    %208 = vmatprep.subr.mxu0 0.0
    %209 = vmatpush1.xpose.msra.mxu0 0.0
    %210 = vmatprep.subr.mxu0 0.0
    %211 = vmatpush1.xpose.msra.mxu0 0.0
    %212 = vmatprep.mubr.f32.mxu0 0.0
    %213 = vmatmul.mubr.f32.gmra.mrb[0].mxu0 %v64
    %v214 = vpop.f32.mrb[0].mxu0
    %v215 = vadd.f32 0.0, %v214
    %v216 = vpop.f32.mrb[0].mxu0
    %217 = vdwg.mxu0
    %v218 = vadd.f32 %v58, %v60
    %v219 = vadd.f32 %v59, %v61
    %v220 = vcombine.high %v57, %v57
    %v222 = vunpack.c.l.s4 1966171168
    %v223 = vunpack.c.0.s8 %v222
    %v224 = vlaneseq
    %v225 = vshrl.u32 %v224, 7
    %v226 = vsub.s32 %v223, %v225
    %v227 = vrot.slane %v57, %v226
    %v229 = vunpack.c.l.s4 1966171168
    %v230 = vunpack.c.0.s8 %v229
    %v231 = vlaneseq
    %v232 = vshrl.u32 %v231, 7
    %v233 = vsub.s32 %v230, %v232
    %v234 = vrot.slane %v220, %v233
    %v235 = vcombine.high %v227, %v227
    %v236 = vcombine.high %v234, %v234
    %v238 = vunpack.c.l.s4 1966171168
    %v239 = vunpack.c.0.s8 %v238
    %v240 = vlaneseq
    %v241 = vshrl.u32 %v240, 7
    %v242 = vsub.s32 %v239, %v241
    %v243 = vrot.slane %v227, %v242
    %v245 = vunpack.c.l.s4 1966171168
    %v246 = vunpack.c.0.s8 %v245
    %v247 = vlaneseq
    %v248 = vshrl.u32 %v247, 7
    %v249 = vsub.s32 %v246, %v248
    %v250 = vrot.slane %v234, %v249
    %v252 = vunpack.c.l.s4 1966171168
    %v253 = vunpack.c.0.s8 %v252
    %v254 = vlaneseq
    %v255 = vshrl.u32 %v254, 7
    %v256 = vsub.s32 %v253, %v255
    %v257 = vrot.slane %v235, %v256
    %v259 = vunpack.c.l.s4 1966171168
    %v260 = vunpack.c.0.s8 %v259
    %v261 = vlaneseq
    %v262 = vshrl.u32 %v261, 7
    %v263 = vsub.s32 %v260, %v262
    %v264 = vrot.slane %v236, %v263
    %v265 = vcombine.high %v243, %v243
    %v266 = vcombine.high %v250, %v250
    %v267 = vcombine.high %v257, %v257
    %v268 = vcombine.high %v264, %v264
    %v269 = vlaneseq
    %v270 = vshrl.u32 %v269, 7
    %v271 = vsub.s32 0, %v270
    %v272 = vrot.slane %v243, %v271
    %v273 = vlaneseq
    %v274 = vshrl.u32 %v273, 7
    %v275 = vsub.s32 0, %v274
    %v276 = vrot.slane %v257, %v275
    %v277 = vlaneseq
    %v278 = vshrl.u32 %v277, 7
    %v279 = vsub.s32 0, %v278
    %v280 = vrot.slane %v265, %v279
    %v281 = vlaneseq
    %v282 = vshrl.u32 %v281, 7
    %v283 = vsub.s32 0, %v282
    %v284 = vrot.slane %v267, %v283
    %v285 = vlaneseq
    %v286 = vshrl.u32 %v285, 7
    %v287 = vsub.s32 0, %v286
    %v288 = vrot.slane %v250, %v287
    %v289 = vlaneseq
    %v290 = vshrl.u32 %v289, 7
    %v291 = vsub.s32 0, %v290
    %v292 = vrot.slane %v264, %v291
    %v293 = vlaneseq
    %v294 = vshrl.u32 %v293, 7
    %v295 = vsub.s32 0, %v294
    %v296 = vrot.slane %v266, %v295
    %v297 = vlaneseq
    %v298 = vshrl.u32 %v297, 7
    %v299 = vsub.s32 0, %v298
    %v300 = vrot.slane %v268, %v299
    %v309 = vmul.f32 %v272, %v58
    %v310 = vmul.f32 %v272, %v59
    %v311 = vmul.f32 %v276, %v58
    %v312 = vmul.f32 %v276, %v59
    %v313 = vmul.f32 %v280, %v58
    %v314 = vmul.f32 %v280, %v59
    %v315 = vmul.f32 %v284, %v58
    %v316 = vmul.f32 %v284, %v59
    %v317 = vmul.f32 %v288, %v58
    %v318 = vmul.f32 %v288, %v59
    %v319 = vmul.f32 %v292, %v58
    %v320 = vmul.f32 %v292, %v59
    %v321 = vmul.f32 %v296, %v58
    %v322 = vmul.f32 %v296, %v59
    %v323 = vmul.f32 %v300, %v58
    %v324 = vmul.f32 %v300, %v59
    %v325 = vmul.f32 %v272, %v60
    %v326 = vmul.f32 %v272, %v61
    %v327 = vmul.f32 %v276, %v60
    %v328 = vmul.f32 %v276, %v61
    %v329 = vmul.f32 %v280, %v60
    %v330 = vmul.f32 %v280, %v61
    %v331 = vmul.f32 %v284, %v60
    %v332 = vmul.f32 %v284, %v61
    %v333 = vmul.f32 %v288, %v60
    %v334 = vmul.f32 %v288, %v61
    %v335 = vmul.f32 %v292, %v60
    %v336 = vmul.f32 %v292, %v61
    %v337 = vmul.f32 %v296, %v60
    %v338 = vmul.f32 %v296, %v61
    %v339 = vmul.f32 %v300, %v60
    %v340 = vmul.f32 %v300, %v61
    %v341 = vmul.f32 %v272, %v218
    %v342 = vmul.f32 %v272, %v219
    %v343 = vmul.f32 %v276, %v218
    %v344 = vmul.f32 %v276, %v219
    %v345 = vmul.f32 %v280, %v218
    %v346 = vmul.f32 %v280, %v219
    %v347 = vmul.f32 %v284, %v218
    %v348 = vmul.f32 %v284, %v219
    %v349 = vmul.f32 %v288, %v218
    %v350 = vmul.f32 %v288, %v219
    %v351 = vmul.f32 %v292, %v218
    %v352 = vmul.f32 %v292, %v219
    %v353 = vmul.f32 %v296, %v218
    %v354 = vmul.f32 %v296, %v219
    %v355 = vmul.f32 %v300, %v218
    %v356 = vmul.f32 %v300, %v219
    %v358 = vsel %vm62, %v309, 0
    %v361 = vsel %vm62, %v310, 0
    %v364 = vsel %vm62, %v311, 0
    %v367 = vsel %vm62, %v312, 0
    %v370 = vsel %vm62, %v313, 0
    %v373 = vsel %vm62, %v314, 0
    %v376 = vsel %vm62, %v315, 0
    %v379 = vsel %vm62, %v316, 0
    %v382 = vsel %vm62, %v317, 0
    %v385 = vsel %vm62, %v318, 0
    %v388 = vsel %vm62, %v319, 0
    %v391 = vsel %vm62, %v320, 0
    %v394 = vsel %vm62, %v321, 0
    %v397 = vsel %vm62, %v322, 0
    %v400 = vsel %vm62, %v323, 0
    %v403 = vsel %vm62, %v324, 0
    %405 = vmatprep.subr.mxu0 0.0
    %406 = vmatpush1.xpose.msra.mxu0 %v67
    %407 = vmatprep.subr.mxu0 0.0
    %408 = vmatpush1.xpose.msra.mxu0 %v70
    %409 = vmatprep.subr.mxu0 0.0
    %410 = vmatpush1.xpose.msra.mxu0 0.0
    %411 = vmatprep.subr.mxu0 0.0
    %412 = vmatpush1.xpose.msra.mxu0 0.0
    %413 = vmatprep.subr.mxu0 0.0
    %414 = vmatpush1.xpose.msra.mxu0 0.0
    %415 = vmatprep.subr.mxu0 0.0
    %416 = vmatpush1.xpose.msra.mxu0 0.0
    %417 = vmatprep.subr.mxu0 0.0
    %418 = vmatpush1.xpose.msra.mxu0 0.0
    %419 = vmatprep.subr.mxu0 0.0
    %420 = vmatpush1.xpose.msra.mxu0 0.0
    %421 = vmatprep.subr.mxu0 0.0
    %422 = vmatpush1.xpose.msra.mxu0 0.0
    %423 = vmatprep.subr.mxu0 0.0
    %424 = vmatpush1.xpose.msra.mxu0 0.0
    %425 = vmatprep.subr.mxu0 0.0
    %426 = vmatpush1.xpose.msra.mxu0 0.0
    %427 = vmatprep.subr.mxu0 0.0
    %428 = vmatpush1.xpose.msra.mxu0 0.0
    %429 = vmatprep.subr.mxu0 0.0
    %430 = vmatpush1.xpose.msra.mxu0 0.0
    %431 = vmatprep.subr.mxu0 0.0
    %432 = vmatpush1.xpose.msra.mxu0 0.0
    %433 = vmatprep.subr.mxu0 0.0
    %434 = vmatpush1.xpose.msra.mxu0 0.0
    %435 = vmatprep.subr.mxu0 0.0
    %436 = vmatpush1.xpose.msra.mxu0 0.0
    %437 = vmatprep.subr.mxu0 0.0
    %438 = vmatpush1.xpose.msra.mxu0 0.0
    %439 = vmatprep.subr.mxu0 0.0
    %440 = vmatpush1.xpose.msra.mxu0 0.0
    %441 = vmatprep.subr.mxu0 0.0
    %442 = vmatpush1.xpose.msra.mxu0 0.0
    %443 = vmatprep.subr.mxu0 0.0
    %444 = vmatpush1.xpose.msra.mxu0 0.0
    %445 = vmatprep.subr.mxu0 0.0
    %446 = vmatpush1.xpose.msra.mxu0 0.0
    %447 = vmatprep.subr.mxu0 0.0
    %448 = vmatpush1.xpose.msra.mxu0 0.0
    %449 = vmatprep.subr.mxu0 0.0
    %450 = vmatpush1.xpose.msra.mxu0 0.0
    %451 = vmatprep.subr.mxu0 0.0
    %452 = vmatpush1.xpose.msra.mxu0 0.0
    %453 = vmatprep.subr.mxu0 0.0
    %454 = vmatpush1.xpose.msra.mxu0 0.0
    %455 = vmatprep.subr.mxu0 0.0
    %456 = vmatpush1.xpose.msra.mxu0 0.0
    %457 = vmatprep.subr.mxu0 0.0
    %458 = vmatpush1.xpose.msra.mxu0 0.0
    %459 = vmatprep.subr.mxu0 0.0
    %460 = vmatpush1.xpose.msra.mxu0 0.0
    %461 = vmatprep.subr.mxu0 0.0
    %462 = vmatpush1.xpose.msra.mxu0 0.0
    %463 = vmatprep.subr.mxu0 0.0
    %464 = vmatpush1.xpose.msra.mxu0 0.0
    %465 = vmatprep.subr.mxu0 0.0
    %466 = vmatpush1.xpose.msra.mxu0 0.0
    %467 = vmatprep.subr.mxu0 0.0
    %468 = vmatpush1.xpose.msra.mxu0 0.0
    %469 = vmatprep.mubr.f32.mxu0 0.0
    %470 = vmatmul.mubr.f32.gmra.mrb[0].mxu0 %v358
    %v471 = vpop.f32.mrb[0].mxu0
    %v472 = vadd.f32 0.0, %v471
    %v473 = vpop.f32.mrb[0].mxu0
    %474 = vmatprep.mubr.f32.mxu0 0.0
    %475 = vmatmul.mubr.f32.gmra.mrb[0].mxu0 %v361
    %v476 = vpop.f32.mrb[0].mxu0
    %v477 = vadd.f32 0.0, %v476
    %v478 = vpop.f32.mrb[0].mxu0
    %479 = vmatprep.mubr.f32.mxu0 0.0
    %480 = vmatmul.mubr.f32.gmra.mrb[0].mxu0 %v364
    %v481 = vpop.f32.mrb[0].mxu0
    %v482 = vadd.f32 0.0, %v481
    %v483 = vpop.f32.mrb[0].mxu0
    %484 = vmatprep.mubr.f32.mxu0 0.0
    %485 = vmatmul.mubr.f32.gmra.mrb[0].mxu0 %v367
    %v486 = vpop.f32.mrb[0].mxu0
    %v487 = vadd.f32 0.0, %v486
    %v488 = vpop.f32.mrb[0].mxu0
    %489 = vmatprep.mubr.f32.mxu0 0.0
    %490 = vmatmul.mubr.f32.gmra.mrb[0].mxu0 %v370
    %v491 = vpop.f32.mrb[0].mxu0
    %v492 = vadd.f32 0.0, %v491
    %v493 = vpop.f32.mrb[0].mxu0
    %494 = vmatprep.mubr.f32.mxu0 0.0
    %495 = vmatmul.mubr.f32.gmra.mrb[0].mxu0 %v373
    %v496 = vpop.f32.mrb[0].mxu0
    %v497 = vadd.f32 0.0, %v496
    %v498 = vpop.f32.mrb[0].mxu0
    %499 = vmatprep.mubr.f32.mxu0 0.0
    %500 = vmatmul.mubr.f32.gmra.mrb[0].mxu0 %v376
    %v501 = vpop.f32.mrb[0].mxu0
    %v502 = vadd.f32 0.0, %v501
    %v503 = vpop.f32.mrb[0].mxu0
    %504 = vmatprep.mubr.f32.mxu0 0.0
    %505 = vmatmul.mubr.f32.gmra.mrb[0].mxu0 %v379
    %v506 = vpop.f32.mrb[0].mxu0
    %v507 = vadd.f32 0.0, %v506
    %v508 = vpop.f32.mrb[0].mxu0
    %509 = vmatprep.mubr.f32.mxu0 0.0
    %510 = vmatmul.mubr.f32.gmra.mrb[0].mxu0 %v382
    %v511 = vpop.f32.mrb[0].mxu0
    %v512 = vadd.f32 0.0, %v511
    %v513 = vpop.f32.mrb[0].mxu0
    %514 = vmatprep.mubr.f32.mxu0 0.0
    %515 = vmatmul.mubr.f32.gmra.mrb[0].mxu0 %v385
    %v516 = vpop.f32.mrb[0].mxu0
    %v517 = vadd.f32 0.0, %v516
    %v518 = vpop.f32.mrb[0].mxu0
    %519 = vmatprep.mubr.f32.mxu0 0.0
    %520 = vmatmul.mubr.f32.gmra.mrb[0].mxu0 %v388
    %v521 = vpop.f32.mrb[0].mxu0
    %v522 = vadd.f32 0.0, %v521
    %v523 = vpop.f32.mrb[0].mxu0
    %524 = vmatprep.mubr.f32.mxu0 0.0
    %525 = vmatmul.mubr.f32.gmra.mrb[0].mxu0 %v391
    %v526 = vpop.f32.mrb[0].mxu0
    %v527 = vadd.f32 0.0, %v526
    %v528 = vpop.f32.mrb[0].mxu0
    %529 = vmatprep.mubr.f32.mxu0 0.0
    %530 = vmatmul.mubr.f32.gmra.mrb[0].mxu0 %v394
    %v531 = vpop.f32.mrb[0].mxu0
    %v532 = vadd.f32 0.0, %v531
    %v533 = vpop.f32.mrb[0].mxu0
    %534 = vmatprep.mubr.f32.mxu0 0.0
    %535 = vmatmul.mubr.f32.gmra.mrb[0].mxu0 %v397
    %v536 = vpop.f32.mrb[0].mxu0
    %v537 = vadd.f32 0.0, %v536
    %v538 = vpop.f32.mrb[0].mxu0
    %539 = vmatprep.mubr.f32.mxu0 0.0
    %540 = vmatmul.mubr.f32.gmra.mrb[0].mxu0 %v400
    %v541 = vpop.f32.mrb[0].mxu0
    %v542 = vadd.f32 0.0, %v541
    %v543 = vpop.f32.mrb[0].mxu0
    %544 = vmatprep.mubr.f32.mxu0 0.0
    %545 = vmatmul.mubr.f32.gmra.mrb[0].mxu0 %v403
    %v546 = vpop.f32.mrb[0].mxu0
    %v547 = vadd.f32 0.0, %v546
    %v548 = vpop.f32.mrb[0].mxu0
    %549 = vdwg.mxu0
    %v551 = vsel %vm62, %v325, 0
    %v554 = vsel %vm62, %v326, 0
    %v557 = vsel %vm62, %v327, 0
    %v560 = vsel %vm62, %v328, 0
    %v563 = vsel %vm62, %v329, 0
    %v566 = vsel %vm62, %v330, 0
    %v569 = vsel %vm62, %v331, 0
    %v572 = vsel %vm62, %v332, 0
    %v575 = vsel %vm62, %v333, 0
    %v578 = vsel %vm62, %v334, 0
    %v581 = vsel %vm62, %v335, 0
    %v584 = vsel %vm62, %v336, 0
    %v587 = vsel %vm62, %v337, 0
    %v590 = vsel %vm62, %v338, 0
    %v593 = vsel %vm62, %v339, 0
    %v596 = vsel %vm62, %v340, 0
    %598 = vmatprep.subr.mxu0 0.0
    %599 = vmatpush1.xpose.msra.mxu0 %v143
    %600 = vmatprep.subr.mxu0 0.0
    %601 = vmatpush1.xpose.msra.mxu0 %v146
    %602 = vmatprep.subr.mxu0 0.0
    %603 = vmatpush1.xpose.msra.mxu0 0.0
    %604 = vmatprep.subr.mxu0 0.0
    %605 = vmatpush1.xpose.msra.mxu0 0.0
    %606 = vmatprep.subr.mxu0 0.0
    %607 = vmatpush1.xpose.msra.mxu0 0.0
    %608 = vmatprep.subr.mxu0 0.0
    %609 = vmatpush1.xpose.msra.mxu0 0.0
    %610 = vmatprep.subr.mxu0 0.0
    %611 = vmatpush1.xpose.msra.mxu0 0.0
    %612 = vmatprep.subr.mxu0 0.0
    %613 = vmatpush1.xpose.msra.mxu0 0.0
    %614 = vmatprep.subr.mxu0 0.0
    %615 = vmatpush1.xpose.msra.mxu0 0.0
    %616 = vmatprep.subr.mxu0 0.0
    %617 = vmatpush1.xpose.msra.mxu0 0.0
    %618 = vmatprep.subr.mxu0 0.0
    %619 = vmatpush1.xpose.msra.mxu0 0.0
    %620 = vmatprep.subr.mxu0 0.0
    %621 = vmatpush1.xpose.msra.mxu0 0.0
    %622 = vmatprep.subr.mxu0 0.0
    %623 = vmatpush1.xpose.msra.mxu0 0.0
    %624 = vmatprep.subr.mxu0 0.0
    %625 = vmatpush1.xpose.msra.mxu0 0.0
    %626 = vmatprep.subr.mxu0 0.0
    %627 = vmatpush1.xpose.msra.mxu0 0.0
    %628 = vmatprep.subr.mxu0 0.0
    %629 = vmatpush1.xpose.msra.mxu0 0.0
    %630 = vmatprep.subr.mxu0 0.0
    %631 = vmatpush1.xpose.msra.mxu0 0.0
    %632 = vmatprep.subr.mxu0 0.0
    %633 = vmatpush1.xpose.msra.mxu0 0.0
    %634 = vmatprep.subr.mxu0 0.0
    %635 = vmatpush1.xpose.msra.mxu0 0.0
    %636 = vmatprep.subr.mxu0 0.0
    %637 = vmatpush1.xpose.msra.mxu0 0.0
    %638 = vmatprep.subr.mxu0 0.0
    %639 = vmatpush1.xpose.msra.mxu0 0.0
    %640 = vmatprep.subr.mxu0 0.0
    %641 = vmatpush1.xpose.msra.mxu0 0.0
    %642 = vmatprep.subr.mxu0 0.0
    %643 = vmatpush1.xpose.msra.mxu0 0.0
    %644 = vmatprep.subr.mxu0 0.0
    %645 = vmatpush1.xpose.msra.mxu0 0.0
    %646 = vmatprep.subr.mxu0 0.0
    %647 = vmatpush1.xpose.msra.mxu0 0.0
    %648 = vmatprep.subr.mxu0 0.0
    %649 = vmatpush1.xpose.msra.mxu0 0.0
    %650 = vmatprep.subr.mxu0 0.0
    %651 = vmatpush1.xpose.msra.mxu0 0.0
    %652 = vmatprep.subr.mxu0 0.0
    %653 = vmatpush1.xpose.msra.mxu0 0.0
    %654 = vmatprep.subr.mxu0 0.0
    %655 = vmatpush1.xpose.msra.mxu0 0.0
    %656 = vmatprep.subr.mxu0 0.0
    %657 = vmatpush1.xpose.msra.mxu0 0.0
    %658 = vmatprep.subr.mxu0 0.0
    %659 = vmatpush1.xpose.msra.mxu0 0.0
    %660 = vmatprep.subr.mxu0 0.0
    %661 = vmatpush1.xpose.msra.mxu0 0.0
    %662 = vmatprep.mubr.f32.mxu0 0.0
    %663 = vmatmul.mubr.f32.gmra.mrb[0].mxu0 %v551
    %v664 = vpop.f32.mrb[0].mxu0
    %v665 = vadd.f32 0.0, %v664
    %v666 = vpop.f32.mrb[0].mxu0
    %667 = vmatprep.mubr.f32.mxu0 0.0
    %668 = vmatmul.mubr.f32.gmra.mrb[0].mxu0 %v554
    %v669 = vpop.f32.mrb[0].mxu0
    %v670 = vadd.f32 0.0, %v669
    %v671 = vpop.f32.mrb[0].mxu0
    %672 = vmatprep.mubr.f32.mxu0 0.0
    %673 = vmatmul.mubr.f32.gmra.mrb[0].mxu0 %v557
    %v674 = vpop.f32.mrb[0].mxu0
    %v675 = vadd.f32 0.0, %v674
    %v676 = vpop.f32.mrb[0].mxu0
    %677 = vmatprep.mubr.f32.mxu0 0.0
    %678 = vmatmul.mubr.f32.gmra.mrb[0].mxu0 %v560
    %v679 = vpop.f32.mrb[0].mxu0
    %v680 = vadd.f32 0.0, %v679
    %v681 = vpop.f32.mrb[0].mxu0
    %682 = vmatprep.mubr.f32.mxu0 0.0
    %683 = vmatmul.mubr.f32.gmra.mrb[0].mxu0 %v563
    %v684 = vpop.f32.mrb[0].mxu0
    %v685 = vadd.f32 0.0, %v684
    %v686 = vpop.f32.mrb[0].mxu0
    %687 = vmatprep.mubr.f32.mxu0 0.0
    %688 = vmatmul.mubr.f32.gmra.mrb[0].mxu0 %v566
    %v689 = vpop.f32.mrb[0].mxu0
    %v690 = vadd.f32 0.0, %v689
    %v691 = vpop.f32.mrb[0].mxu0
    %692 = vmatprep.mubr.f32.mxu0 0.0
    %693 = vmatmul.mubr.f32.gmra.mrb[0].mxu0 %v569
    %v694 = vpop.f32.mrb[0].mxu0
    %v695 = vadd.f32 0.0, %v694
    %v696 = vpop.f32.mrb[0].mxu0
    %697 = vmatprep.mubr.f32.mxu0 0.0
    %698 = vmatmul.mubr.f32.gmra.mrb[0].mxu0 %v572
    %v699 = vpop.f32.mrb[0].mxu0
    %v700 = vadd.f32 0.0, %v699
    %v701 = vpop.f32.mrb[0].mxu0
    %702 = vmatprep.mubr.f32.mxu0 0.0
    %703 = vmatmul.mubr.f32.gmra.mrb[0].mxu0 %v575
    %v704 = vpop.f32.mrb[0].mxu0
    %v705 = vadd.f32 0.0, %v704
    %v706 = vpop.f32.mrb[0].mxu0
    %707 = vmatprep.mubr.f32.mxu0 0.0
    %708 = vmatmul.mubr.f32.gmra.mrb[0].mxu0 %v578
    %v709 = vpop.f32.mrb[0].mxu0
    %v710 = vadd.f32 0.0, %v709
    %v711 = vpop.f32.mrb[0].mxu0
    %712 = vmatprep.mubr.f32.mxu0 0.0
    %713 = vmatmul.mubr.f32.gmra.mrb[0].mxu0 %v581
    %v714 = vpop.f32.mrb[0].mxu0
    %v715 = vadd.f32 0.0, %v714
    %v716 = vpop.f32.mrb[0].mxu0
    %717 = vmatprep.mubr.f32.mxu0 0.0
    %718 = vmatmul.mubr.f32.gmra.mrb[0].mxu0 %v584
    %v719 = vpop.f32.mrb[0].mxu0
    %v720 = vadd.f32 0.0, %v719
    %v721 = vpop.f32.mrb[0].mxu0
    %722 = vmatprep.mubr.f32.mxu0 0.0
    %723 = vmatmul.mubr.f32.gmra.mrb[0].mxu0 %v587
    %v724 = vpop.f32.mrb[0].mxu0
    %v725 = vadd.f32 0.0, %v724
    %v726 = vpop.f32.mrb[0].mxu0
    %727 = vmatprep.mubr.f32.mxu0 0.0
    %728 = vmatmul.mubr.f32.gmra.mrb[0].mxu0 %v590
    %v729 = vpop.f32.mrb[0].mxu0
    %v730 = vadd.f32 0.0, %v729
    %v731 = vpop.f32.mrb[0].mxu0
    %732 = vmatprep.mubr.f32.mxu0 0.0
    %733 = vmatmul.mubr.f32.gmra.mrb[0].mxu0 %v593
    %v734 = vpop.f32.mrb[0].mxu0
    %v735 = vadd.f32 0.0, %v734
    %v736 = vpop.f32.mrb[0].mxu0
    %737 = vmatprep.mubr.f32.mxu0 0.0
    %738 = vmatmul.mubr.f32.gmra.mrb[0].mxu0 %v596
    %v739 = vpop.f32.mrb[0].mxu0
    %v740 = vadd.f32 0.0, %v739
    %v741 = vpop.f32.mrb[0].mxu0
    %742 = vdwg.mxu0
    %v744 = vsel %vm62, %v341, 0
    %v747 = vsel %vm62, %v342, 0
    %v750 = vsel %vm62, %v343, 0
    %v753 = vsel %vm62, %v344, 0
    %v756 = vsel %vm62, %v345, 0
    %v759 = vsel %vm62, %v346, 0
    %v762 = vsel %vm62, %v347, 0
    %v765 = vsel %vm62, %v348, 0
    %v768 = vsel %vm62, %v349, 0
    %v771 = vsel %vm62, %v350, 0
    %v774 = vsel %vm62, %v351, 0
    %v777 = vsel %vm62, %v352, 0
    %v780 = vsel %vm62, %v353, 0
    %v783 = vsel %vm62, %v354, 0
    %v786 = vsel %vm62, %v355, 0
    %v789 = vsel %vm62, %v356, 0
    %v792 = vsel %vm62, %v218, 0
    %v795 = vsel %vm62, %v219, 0
    %797 = vmatprep.subr.mxu0 0.0
    %798 = vmatpush1.xpose.msra.mxu0 %v792
    %799 = vmatprep.subr.mxu0 0.0
    %800 = vmatpush1.xpose.msra.mxu0 %v795
    %801 = vmatprep.subr.mxu0 0.0
    %802 = vmatpush1.xpose.msra.mxu0 0.0
    %803 = vmatprep.subr.mxu0 0.0
    %804 = vmatpush1.xpose.msra.mxu0 0.0
    %805 = vmatprep.subr.mxu0 0.0
    %806 = vmatpush1.xpose.msra.mxu0 0.0
    %807 = vmatprep.subr.mxu0 0.0
    %808 = vmatpush1.xpose.msra.mxu0 0.0
    %809 = vmatprep.subr.mxu0 0.0
    %810 = vmatpush1.xpose.msra.mxu0 0.0
    %811 = vmatprep.subr.mxu0 0.0
    %812 = vmatpush1.xpose.msra.mxu0 0.0
    %813 = vmatprep.subr.mxu0 0.0
    %814 = vmatpush1.xpose.msra.mxu0 0.0
    %815 = vmatprep.subr.mxu0 0.0
    %816 = vmatpush1.xpose.msra.mxu0 0.0
    %817 = vmatprep.subr.mxu0 0.0
    %818 = vmatpush1.xpose.msra.mxu0 0.0
    %819 = vmatprep.subr.mxu0 0.0
    %820 = vmatpush1.xpose.msra.mxu0 0.0
    %821 = vmatprep.subr.mxu0 0.0
    %822 = vmatpush1.xpose.msra.mxu0 0.0
    %823 = vmatprep.subr.mxu0 0.0
    %824 = vmatpush1.xpose.msra.mxu0 0.0
    %825 = vmatprep.subr.mxu0 0.0
    %826 = vmatpush1.xpose.msra.mxu0 0.0
    %827 = vmatprep.subr.mxu0 0.0
    %828 = vmatpush1.xpose.msra.mxu0 0.0
    %829 = vmatprep.subr.mxu0 0.0
    %830 = vmatpush1.xpose.msra.mxu0 0.0
    %831 = vmatprep.subr.mxu0 0.0
    %832 = vmatpush1.xpose.msra.mxu0 0.0
    %833 = vmatprep.subr.mxu0 0.0
    %834 = vmatpush1.xpose.msra.mxu0 0.0
    %835 = vmatprep.subr.mxu0 0.0
    %836 = vmatpush1.xpose.msra.mxu0 0.0
    %837 = vmatprep.subr.mxu0 0.0
    %838 = vmatpush1.xpose.msra.mxu0 0.0
    %839 = vmatprep.subr.mxu0 0.0
    %840 = vmatpush1.xpose.msra.mxu0 0.0
    %841 = vmatprep.subr.mxu0 0.0
    %842 = vmatpush1.xpose.msra.mxu0 0.0
    %843 = vmatprep.subr.mxu0 0.0
    %844 = vmatpush1.xpose.msra.mxu0 0.0
    %845 = vmatprep.subr.mxu0 0.0
    %846 = vmatpush1.xpose.msra.mxu0 0.0
    %847 = vmatprep.subr.mxu0 0.0
    %848 = vmatpush1.xpose.msra.mxu0 0.0
    %849 = vmatprep.subr.mxu0 0.0
    %850 = vmatpush1.xpose.msra.mxu0 0.0
    %851 = vmatprep.subr.mxu0 0.0
    %852 = vmatpush1.xpose.msra.mxu0 0.0
    %853 = vmatprep.subr.mxu0 0.0
    %854 = vmatpush1.xpose.msra.mxu0 0.0
    %855 = vmatprep.subr.mxu0 0.0
    %856 = vmatpush1.xpose.msra.mxu0 0.0
    %857 = vmatprep.subr.mxu0 0.0
    %858 = vmatpush1.xpose.msra.mxu0 0.0
    %859 = vmatprep.subr.mxu0 0.0
    %860 = vmatpush1.xpose.msra.mxu0 0.0
    %861 = vmatprep.mubr.f32.mxu0 0.0
    %862 = vmatmul.mubr.f32.gmra.mrb[0].mxu0 %v744
    %v863 = vpop.f32.mrb[0].mxu0
    %v864 = vadd.f32 0.0, %v863
    %v865 = vpop.f32.mrb[0].mxu0
    %866 = vmatprep.mubr.f32.mxu0 0.0
    %867 = vmatmul.mubr.f32.gmra.mrb[0].mxu0 %v747
    %v868 = vpop.f32.mrb[0].mxu0
    %v869 = vadd.f32 0.0, %v868
    %v870 = vpop.f32.mrb[0].mxu0
    %871 = vmatprep.mubr.f32.mxu0 0.0
    %872 = vmatmul.mubr.f32.gmra.mrb[0].mxu0 %v750
    %v873 = vpop.f32.mrb[0].mxu0
    %v874 = vadd.f32 0.0, %v873
    %v875 = vpop.f32.mrb[0].mxu0
    %876 = vmatprep.mubr.f32.mxu0 0.0
    %877 = vmatmul.mubr.f32.gmra.mrb[0].mxu0 %v753
    %v878 = vpop.f32.mrb[0].mxu0
    %v879 = vadd.f32 0.0, %v878
    %v880 = vpop.f32.mrb[0].mxu0
    %881 = vmatprep.mubr.f32.mxu0 0.0
    %882 = vmatmul.mubr.f32.gmra.mrb[0].mxu0 %v756
    %v883 = vpop.f32.mrb[0].mxu0
    %v884 = vadd.f32 0.0, %v883
    %v885 = vpop.f32.mrb[0].mxu0
    %886 = vmatprep.mubr.f32.mxu0 0.0
    %887 = vmatmul.mubr.f32.gmra.mrb[0].mxu0 %v759
    %v888 = vpop.f32.mrb[0].mxu0
    %v889 = vadd.f32 0.0, %v888
    %v890 = vpop.f32.mrb[0].mxu0
    %891 = vmatprep.mubr.f32.mxu0 0.0
    %892 = vmatmul.mubr.f32.gmra.mrb[0].mxu0 %v762
    %v893 = vpop.f32.mrb[0].mxu0
    %v894 = vadd.f32 0.0, %v893
    %v895 = vpop.f32.mrb[0].mxu0
    %896 = vmatprep.mubr.f32.mxu0 0.0
    %897 = vmatmul.mubr.f32.gmra.mrb[0].mxu0 %v765
    %v898 = vpop.f32.mrb[0].mxu0
    %v899 = vadd.f32 0.0, %v898
    %v900 = vpop.f32.mrb[0].mxu0
    %901 = vmatprep.mubr.f32.mxu0 0.0
    %902 = vmatmul.mubr.f32.gmra.mrb[0].mxu0 %v768
    %v903 = vpop.f32.mrb[0].mxu0
    %v904 = vadd.f32 0.0, %v903
    %v905 = vpop.f32.mrb[0].mxu0
    %906 = vmatprep.mubr.f32.mxu0 0.0
    %907 = vmatmul.mubr.f32.gmra.mrb[0].mxu0 %v771
    %v908 = vpop.f32.mrb[0].mxu0
    %v909 = vadd.f32 0.0, %v908
    %v910 = vpop.f32.mrb[0].mxu0
    %911 = vmatprep.mubr.f32.mxu0 0.0
    %912 = vmatmul.mubr.f32.gmra.mrb[0].mxu0 %v774
    %v913 = vpop.f32.mrb[0].mxu0
    %v914 = vadd.f32 0.0, %v913
    %v915 = vpop.f32.mrb[0].mxu0
    %916 = vmatprep.mubr.f32.mxu0 0.0
    %917 = vmatmul.mubr.f32.gmra.mrb[0].mxu0 %v777
    %v918 = vpop.f32.mrb[0].mxu0
    %v919 = vadd.f32 0.0, %v918
    %v920 = vpop.f32.mrb[0].mxu0
    %921 = vmatprep.mubr.f32.mxu0 0.0
    %922 = vmatmul.mubr.f32.gmra.mrb[0].mxu0 %v780
    %v923 = vpop.f32.mrb[0].mxu0
    %v924 = vadd.f32 0.0, %v923
    %v925 = vpop.f32.mrb[0].mxu0
    %926 = vmatprep.mubr.f32.mxu0 0.0
    %927 = vmatmul.mubr.f32.gmra.mrb[0].mxu0 %v783
    %v928 = vpop.f32.mrb[0].mxu0
    %v929 = vadd.f32 0.0, %v928
    %v930 = vpop.f32.mrb[0].mxu0
    %931 = vmatprep.mubr.f32.mxu0 0.0
    %932 = vmatmul.mubr.f32.gmra.mrb[0].mxu0 %v786
    %v933 = vpop.f32.mrb[0].mxu0
    %v934 = vadd.f32 0.0, %v933
    %v935 = vpop.f32.mrb[0].mxu0
    %936 = vmatprep.mubr.f32.mxu0 0.0
    %937 = vmatmul.mubr.f32.gmra.mrb[0].mxu0 %v789
    %v938 = vpop.f32.mrb[0].mxu0
    %v939 = vadd.f32 0.0, %v938
    %v940 = vpop.f32.mrb[0].mxu0
    %941 = vdwg.mxu0
    %v942 = vsub.f32 %v472, %v665
    %v943 = vsub.f32 %v477, %v670
    %v944 = vsub.f32 %v482, %v675
    %v945 = vsub.f32 %v487, %v680
    %v946 = vsub.f32 %v492, %v685
    %v947 = vsub.f32 %v497, %v690
    %v948 = vsub.f32 %v502, %v695
    %v949 = vsub.f32 %v507, %v700
    %v950 = vsub.f32 %v512, %v705
    %v951 = vsub.f32 %v517, %v710
    %v952 = vsub.f32 %v522, %v715
    %v953 = vsub.f32 %v527, %v720
    %v954 = vsub.f32 %v532, %v725
    %v955 = vsub.f32 %v537, %v730
    %v956 = vsub.f32 %v542, %v735
    %v957 = vsub.f32 %v547, %v740
    %v958 = vadd.f32 %v472, %v665
    %v959 = vadd.f32 %v477, %v670
    %v960 = vadd.f32 %v482, %v675
    %v961 = vadd.f32 %v487, %v680
    %v962 = vadd.f32 %v492, %v685
    %v963 = vadd.f32 %v497, %v690
    %v964 = vadd.f32 %v502, %v695
    %v965 = vadd.f32 %v507, %v700
    %v966 = vadd.f32 %v512, %v705
    %v967 = vadd.f32 %v517, %v710
    %v968 = vadd.f32 %v522, %v715
    %v969 = vadd.f32 %v527, %v720
    %v970 = vadd.f32 %v532, %v725
    %v971 = vadd.f32 %v537, %v730
    %v972 = vadd.f32 %v542, %v735
    %v973 = vadd.f32 %v547, %v740
    %v974 = vsub.f32 %v958, %v864
    %v975 = vsub.f32 %v959, %v869
    %v976 = vsub.f32 %v960, %v874
    %v977 = vsub.f32 %v961, %v879
    %v978 = vsub.f32 %v962, %v884
    %v979 = vsub.f32 %v963, %v889
    %v980 = vsub.f32 %v964, %v894
    %v981 = vsub.f32 %v965, %v899
    %v982 = vsub.f32 %v966, %v904
    %v983 = vsub.f32 %v967, %v909
    %v984 = vsub.f32 %v968, %v914
    %v985 = vsub.f32 %v969, %v919
    %v986 = vsub.f32 %v970, %v924
    %v987 = vsub.f32 %v971, %v929
    %v988 = vsub.f32 %v972, %v934
    %v989 = vsub.f32 %v973, %v939
    %v990 = vlaneseq
    %v991 = vshrl.u32 %v990, 7
    %v992 = vsub.s32 0, %v991
    %v993 = vrot.slane %v139, %v992
    %995 = vbcast.lane.b32.xlu0 %v993, 256
    %v996 = vpop.permute.xlu0 %995
    %s998 = sor.u32 256, 8
    %999 = vbcast.lane.b32.xlu0 %v993, %s998
    %v1000 = vpop.permute.xlu0 %999
    %v1001 = vlaneseq
    %v1002 = vshrl.u32 %v1001, 7
    %v1003 = vsub.s32 1, %v1002
    %v1004 = vrot.slane %v139, %v1003
    %1006 = vbcast.lane.b32.xlu0 %v1004, 256
    %v1007 = vpop.permute.xlu0 %1006
    %s1009 = sor.u32 256, 8
    %1010 = vbcast.lane.b32.xlu0 %v1004, %s1009
    %v1011 = vpop.permute.xlu0 %1010
    %v1012 = vlaneseq
    %v1013 = vshrl.u32 %v1012, 7
    %v1014 = vsub.s32 2, %v1013
    %v1015 = vrot.slane %v139, %v1014
    %1017 = vbcast.lane.b32.xlu0 %v1015, 256
    %v1018 = vpop.permute.xlu0 %1017
    %s1020 = sor.u32 256, 8
    %1021 = vbcast.lane.b32.xlu0 %v1015, %s1020
    %v1022 = vpop.permute.xlu0 %1021
    %v1023 = vlaneseq
    %v1024 = vshrl.u32 %v1023, 7
    %v1025 = vsub.s32 3, %v1024
    %v1026 = vrot.slane %v139, %v1025
    %1028 = vbcast.lane.b32.xlu0 %v1026, 256
    %v1029 = vpop.permute.xlu0 %1028
    %s1031 = sor.u32 256, 8
    %1032 = vbcast.lane.b32.xlu0 %v1026, %s1031
    %v1033 = vpop.permute.xlu0 %1032
    %v1034 = vlaneseq
    %v1035 = vshrl.u32 %v1034, 7
    %v1036 = vsub.s32 4, %v1035
    %v1037 = vrot.slane %v139, %v1036
    %1039 = vbcast.lane.b32.xlu0 %v1037, 256
    %v1040 = vpop.permute.xlu0 %1039
    %s1042 = sor.u32 256, 8
    %1043 = vbcast.lane.b32.xlu0 %v1037, %s1042
    %v1044 = vpop.permute.xlu0 %1043
    %v1045 = vlaneseq
    %v1046 = vshrl.u32 %v1045, 7
    %v1047 = vsub.s32 5, %v1046
    %v1048 = vrot.slane %v139, %v1047
    %1050 = vbcast.lane.b32.xlu0 %v1048, 256
    %v1051 = vpop.permute.xlu0 %1050
    %s1053 = sor.u32 256, 8
    %1054 = vbcast.lane.b32.xlu0 %v1048, %s1053
    %v1055 = vpop.permute.xlu0 %1054
    %v1056 = vlaneseq
    %v1057 = vshrl.u32 %v1056, 7
    %v1058 = vsub.s32 6, %v1057
    %v1059 = vrot.slane %v139, %v1058
    %1061 = vbcast.lane.b32.xlu0 %v1059, 256
    %v1062 = vpop.permute.xlu0 %1061
    %s1064 = sor.u32 256, 8
    %1065 = vbcast.lane.b32.xlu0 %v1059, %s1064
    %v1066 = vpop.permute.xlu0 %1065
    %v1067 = vlaneseq
    %v1068 = vshrl.u32 %v1067, 7
    %v1069 = vsub.s32 7, %v1068
    %v1070 = vrot.slane %v139, %v1069
    %1072 = vbcast.lane.b32.xlu0 %v1070, 256
    %v1073 = vpop.permute.xlu0 %1072
    %s1075 = sor.u32 256, 8
    %1076 = vbcast.lane.b32.xlu0 %v1070, %s1075
    %v1077 = vpop.permute.xlu0 %1076
    %v1079 = vcombine.high %v139, %v139
    %v1081 = vunpack.c.l.s4 1966171168
    %v1082 = vunpack.c.0.s8 %v1081
    %v1083 = vlaneseq
    %v1084 = vshrl.u32 %v1083, 7
    %v1085 = vsub.s32 %v1082, %v1084
    %v1086 = vrot.slane %v139, %v1085
    %v1088 = vunpack.c.l.s4 1966171168
    %v1089 = vunpack.c.0.s8 %v1088
    %v1090 = vlaneseq
    %v1091 = vshrl.u32 %v1090, 7
    %v1092 = vsub.s32 %v1089, %v1091
    %v1093 = vrot.slane %v1079, %v1092
    %v1094 = vcombine.high %v1086, %v1086
    %v1095 = vcombine.high %v1093, %v1093
    %v1097 = vunpack.c.l.s4 1966171168
    %v1098 = vunpack.c.0.s8 %v1097
    %v1099 = vlaneseq
    %v1100 = vshrl.u32 %v1099, 7
    %v1101 = vsub.s32 %v1098, %v1100
    %v1102 = vrot.slane %v1086, %v1101
    %v1104 = vunpack.c.l.s4 1966171168
    %v1105 = vunpack.c.0.s8 %v1104
    %v1106 = vlaneseq
    %v1107 = vshrl.u32 %v1106, 7
    %v1108 = vsub.s32 %v1105, %v1107
    %v1109 = vrot.slane %v1093, %v1108
    %v1111 = vunpack.c.l.s4 1966171168
    %v1112 = vunpack.c.0.s8 %v1111
    %v1113 = vlaneseq
    %v1114 = vshrl.u32 %v1113, 7
    %v1115 = vsub.s32 %v1112, %v1114
    %v1116 = vrot.slane %v1094, %v1115
    %v1118 = vunpack.c.l.s4 1966171168
    %v1119 = vunpack.c.0.s8 %v1118
    %v1120 = vlaneseq
    %v1121 = vshrl.u32 %v1120, 7
    %v1122 = vsub.s32 %v1119, %v1121
    %v1123 = vrot.slane %v1095, %v1122
    %v1124 = vcombine.high %v1102, %v1102
    %v1125 = vcombine.high %v1109, %v1109
    %v1126 = vcombine.high %v1116, %v1116
    %v1127 = vcombine.high %v1123, %v1123
    %v1128 = vlaneseq
    %v1129 = vshrl.u32 %v1128, 7
    %v1130 = vsub.s32 0, %v1129
    %v1131 = vrot.slane %v215, %v1130
    %1133 = vbcast.lane.b32.xlu0 %v1131, 256
    %v1134 = vpop.permute.xlu0 %1133
    %s1136 = sor.u32 256, 8
    %1137 = vbcast.lane.b32.xlu0 %v1131, %s1136
    %v1138 = vpop.permute.xlu0 %1137
    %v1139 = vlaneseq
    %v1140 = vshrl.u32 %v1139, 7
    %v1141 = vsub.s32 1, %v1140
    %v1142 = vrot.slane %v215, %v1141
    %1144 = vbcast.lane.b32.xlu0 %v1142, 256
    %v1145 = vpop.permute.xlu0 %1144
    %s1147 = sor.u32 256, 8
    %1148 = vbcast.lane.b32.xlu0 %v1142, %s1147
    %v1149 = vpop.permute.xlu0 %1148
    %v1150 = vlaneseq
    %v1151 = vshrl.u32 %v1150, 7
    %v1152 = vsub.s32 2, %v1151
    %v1153 = vrot.slane %v215, %v1152
    %1155 = vbcast.lane.b32.xlu0 %v1153, 256
    %v1156 = vpop.permute.xlu0 %1155
    %s1158 = sor.u32 256, 8
    %1159 = vbcast.lane.b32.xlu0 %v1153, %s1158
    %v1160 = vpop.permute.xlu0 %1159
    %v1161 = vlaneseq
    %v1162 = vshrl.u32 %v1161, 7
    %v1163 = vsub.s32 3, %v1162
    %v1164 = vrot.slane %v215, %v1163
    %1166 = vbcast.lane.b32.xlu0 %v1164, 256
    %v1167 = vpop.permute.xlu0 %1166
    %s1169 = sor.u32 256, 8
    %1170 = vbcast.lane.b32.xlu0 %v1164, %s1169
    %v1171 = vpop.permute.xlu0 %1170
    %v1172 = vlaneseq
    %v1173 = vshrl.u32 %v1172, 7
    %v1174 = vsub.s32 4, %v1173
    %v1175 = vrot.slane %v215, %v1174
    %1177 = vbcast.lane.b32.xlu0 %v1175, 256
    %v1178 = vpop.permute.xlu0 %1177
    %s1180 = sor.u32 256, 8
    %1181 = vbcast.lane.b32.xlu0 %v1175, %s1180
    %v1182 = vpop.permute.xlu0 %1181
    %v1183 = vlaneseq
    %v1184 = vshrl.u32 %v1183, 7
    %v1185 = vsub.s32 5, %v1184
    %v1186 = vrot.slane %v215, %v1185
    %1188 = vbcast.lane.b32.xlu0 %v1186, 256
    %v1189 = vpop.permute.xlu0 %1188
    %s1191 = sor.u32 256, 8
    %1192 = vbcast.lane.b32.xlu0 %v1186, %s1191
    %v1193 = vpop.permute.xlu0 %1192
    %v1194 = vlaneseq
    %v1195 = vshrl.u32 %v1194, 7
    %v1196 = vsub.s32 6, %v1195
    %v1197 = vrot.slane %v215, %v1196
    %1199 = vbcast.lane.b32.xlu0 %v1197, 256
    %v1200 = vpop.permute.xlu0 %1199
    %s1202 = sor.u32 256, 8
    %1203 = vbcast.lane.b32.xlu0 %v1197, %s1202
    %v1204 = vpop.permute.xlu0 %1203
    %v1205 = vlaneseq
    %v1206 = vshrl.u32 %v1205, 7
    %v1207 = vsub.s32 7, %v1206
    %v1208 = vrot.slane %v215, %v1207
    %1210 = vbcast.lane.b32.xlu0 %v1208, 256
    %v1211 = vpop.permute.xlu0 %1210
    %s1213 = sor.u32 256, 8
    %1214 = vbcast.lane.b32.xlu0 %v1208, %s1213
    %v1215 = vpop.permute.xlu0 %1214
    %v1217 = vcombine.high %v215, %v215
    %v1219 = vunpack.c.l.s4 1966171168
    %v1220 = vunpack.c.0.s8 %v1219
    %v1221 = vlaneseq
    %v1222 = vshrl.u32 %v1221, 7
    %v1223 = vsub.s32 %v1220, %v1222
    %v1224 = vrot.slane %v215, %v1223
    %v1226 = vunpack.c.l.s4 1966171168
    %v1227 = vunpack.c.0.s8 %v1226
    %v1228 = vlaneseq
    %v1229 = vshrl.u32 %v1228, 7
    %v1230 = vsub.s32 %v1227, %v1229
    %v1231 = vrot.slane %v1217, %v1230
    %v1232 = vcombine.high %v1224, %v1224
    %v1233 = vcombine.high %v1231, %v1231
    %v1235 = vunpack.c.l.s4 1966171168
    %v1236 = vunpack.c.0.s8 %v1235
    %v1237 = vlaneseq
    %v1238 = vshrl.u32 %v1237, 7
    %v1239 = vsub.s32 %v1236, %v1238
    %v1240 = vrot.slane %v1224, %v1239
    %v1242 = vunpack.c.l.s4 1966171168
    %v1243 = vunpack.c.0.s8 %v1242
    %v1244 = vlaneseq
    %v1245 = vshrl.u32 %v1244, 7
    %v1246 = vsub.s32 %v1243, %v1245
    %v1247 = vrot.slane %v1231, %v1246
    %v1249 = vunpack.c.l.s4 1966171168
    %v1250 = vunpack.c.0.s8 %v1249
    %v1251 = vlaneseq
    %v1252 = vshrl.u32 %v1251, 7
    %v1253 = vsub.s32 %v1250, %v1252
    %v1254 = vrot.slane %v1232, %v1253
    %v1256 = vunpack.c.l.s4 1966171168
    %v1257 = vunpack.c.0.s8 %v1256
    %v1258 = vlaneseq
    %v1259 = vshrl.u32 %v1258, 7
    %v1260 = vsub.s32 %v1257, %v1259
    %v1261 = vrot.slane %v1233, %v1260
    %v1262 = vcombine.high %v1240, %v1240
    %v1263 = vcombine.high %v1247, %v1247
    %v1264 = vcombine.high %v1254, %v1254
    %v1265 = vcombine.high %v1261, %v1261
    %v1266 = vlaneseq
    %v1267 = vshrl.u32 %v1266, 7
    %v1268 = vsub.s32 0, %v1267
    %v1269 = vrot.slane %v1102, %v1268
    %v1270 = vlaneseq
    %v1271 = vshrl.u32 %v1270, 7
    %v1272 = vsub.s32 0, %v1271
    %v1273 = vrot.slane %v1116, %v1272
    %v1274 = vlaneseq
    %v1275 = vshrl.u32 %v1274, 7
    %v1276 = vsub.s32 0, %v1275
    %v1277 = vrot.slane %v1124, %v1276
    %v1278 = vlaneseq
    %v1279 = vshrl.u32 %v1278, 7
    %v1280 = vsub.s32 0, %v1279
    %v1281 = vrot.slane %v1126, %v1280
    %v1282 = vlaneseq
    %v1283 = vshrl.u32 %v1282, 7
    %v1284 = vsub.s32 0, %v1283
    %v1285 = vrot.slane %v1109, %v1284
    %v1286 = vlaneseq
    %v1287 = vshrl.u32 %v1286, 7
    %v1288 = vsub.s32 0, %v1287
    %v1289 = vrot.slane %v1123, %v1288
    %v1290 = vlaneseq
    %v1291 = vshrl.u32 %v1290, 7
    %v1292 = vsub.s32 0, %v1291
    %v1293 = vrot.slane %v1125, %v1292
    %v1294 = vlaneseq
    %v1295 = vshrl.u32 %v1294, 7
    %v1296 = vsub.s32 0, %v1295
    %v1297 = vrot.slane %v1127, %v1296
    %v1306 = vmul.f32 %v996, %v1269
    %v1307 = vmul.f32 %v1000, %v1269
    %v1308 = vmul.f32 %v1007, %v1273
    %v1309 = vmul.f32 %v1011, %v1273
    %v1310 = vmul.f32 %v1018, %v1277
    %v1311 = vmul.f32 %v1022, %v1277
    %v1312 = vmul.f32 %v1029, %v1281
    %v1313 = vmul.f32 %v1033, %v1281
    %v1314 = vmul.f32 %v1040, %v1285
    %v1315 = vmul.f32 %v1044, %v1285
    %v1316 = vmul.f32 %v1051, %v1289
    %v1317 = vmul.f32 %v1055, %v1289
    %v1318 = vmul.f32 %v1062, %v1293
    %v1319 = vmul.f32 %v1066, %v1293
    %v1320 = vmul.f32 %v1073, %v1297
    %v1321 = vmul.f32 %v1077, %v1297
    %v1322 = vlaneseq
    %v1323 = vshrl.u32 %v1322, 7
    %v1324 = vsub.s32 0, %v1323
    %v1325 = vrot.slane %v1240, %v1324
    %v1326 = vlaneseq
    %v1327 = vshrl.u32 %v1326, 7
    %v1328 = vsub.s32 0, %v1327
    %v1329 = vrot.slane %v1254, %v1328
    %v1330 = vlaneseq
    %v1331 = vshrl.u32 %v1330, 7
    %v1332 = vsub.s32 0, %v1331
    %v1333 = vrot.slane %v1262, %v1332
    %v1334 = vlaneseq
    %v1335 = vshrl.u32 %v1334, 7
    %v1336 = vsub.s32 0, %v1335
    %v1337 = vrot.slane %v1264, %v1336
    %v1338 = vlaneseq
    %v1339 = vshrl.u32 %v1338, 7
    %v1340 = vsub.s32 0, %v1339
    %v1341 = vrot.slane %v1247, %v1340
    %v1342 = vlaneseq
    %v1343 = vshrl.u32 %v1342, 7
    %v1344 = vsub.s32 0, %v1343
    %v1345 = vrot.slane %v1261, %v1344
    %v1346 = vlaneseq
    %v1347 = vshrl.u32 %v1346, 7
    %v1348 = vsub.s32 0, %v1347
    %v1349 = vrot.slane %v1263, %v1348
    %v1350 = vlaneseq
    %v1351 = vshrl.u32 %v1350, 7
    %v1352 = vsub.s32 0, %v1351
    %v1353 = vrot.slane %v1265, %v1352
    %v1362 = vmul.f32 %v1134, %v1325
    %v1363 = vmul.f32 %v1138, %v1325
    %v1364 = vmul.f32 %v1145, %v1329
    %v1365 = vmul.f32 %v1149, %v1329
    %v1366 = vmul.f32 %v1156, %v1333
    %v1367 = vmul.f32 %v1160, %v1333
    %v1368 = vmul.f32 %v1167, %v1337
    %v1369 = vmul.f32 %v1171, %v1337
    %v1370 = vmul.f32 %v1178, %v1341
    %v1371 = vmul.f32 %v1182, %v1341
    %v1372 = vmul.f32 %v1189, %v1345
    %v1373 = vmul.f32 %v1193, %v1345
    %v1374 = vmul.f32 %v1200, %v1349
    %v1375 = vmul.f32 %v1204, %v1349
    %v1376 = vmul.f32 %v1211, %v1353
    %v1377 = vmul.f32 %v1215, %v1353
    %v1378 = vsub.f32 %v1306, %v1362
    %v1379 = vsub.f32 %v1307, %v1363
    %v1380 = vsub.f32 %v1308, %v1364
    %v1381 = vsub.f32 %v1309, %v1365
    %v1382 = vsub.f32 %v1310, %v1366
    %v1383 = vsub.f32 %v1311, %v1367
    %v1384 = vsub.f32 %v1312, %v1368
    %v1385 = vsub.f32 %v1313, %v1369
    %v1386 = vsub.f32 %v1314, %v1370
    %v1387 = vsub.f32 %v1315, %v1371
    %v1388 = vsub.f32 %v1316, %v1372
    %v1389 = vsub.f32 %v1317, %v1373
    %v1390 = vsub.f32 %v1318, %v1374
    %v1391 = vsub.f32 %v1319, %v1375
    %v1392 = vsub.f32 %v1320, %v1376
    %v1393 = vsub.f32 %v1321, %v1377
    %v1394 = vmul.f32 %v996, %v1325
    %v1395 = vmul.f32 %v1000, %v1325
    %v1396 = vmul.f32 %v1007, %v1329
    %v1397 = vmul.f32 %v1011, %v1329
    %v1398 = vmul.f32 %v1018, %v1333
    %v1399 = vmul.f32 %v1022, %v1333
    %v1400 = vmul.f32 %v1029, %v1337
    %v1401 = vmul.f32 %v1033, %v1337
    %v1402 = vmul.f32 %v1040, %v1341
    %v1403 = vmul.f32 %v1044, %v1341
    %v1404 = vmul.f32 %v1051, %v1345
    %v1405 = vmul.f32 %v1055, %v1345
    %v1406 = vmul.f32 %v1062, %v1349
    %v1407 = vmul.f32 %v1066, %v1349
    %v1408 = vmul.f32 %v1073, %v1353
    %v1409 = vmul.f32 %v1077, %v1353
    %v1410 = vmul.f32 %v1134, %v1269
    %v1411 = vmul.f32 %v1138, %v1269
    %v1412 = vmul.f32 %v1145, %v1273
    %v1413 = vmul.f32 %v1149, %v1273
    %v1414 = vmul.f32 %v1156, %v1277
    %v1415 = vmul.f32 %v1160, %v1277
    %v1416 = vmul.f32 %v1167, %v1281
    %v1417 = vmul.f32 %v1171, %v1281
    %v1418 = vmul.f32 %v1178, %v1285
    %v1419 = vmul.f32 %v1182, %v1285
    %v1420 = vmul.f32 %v1189, %v1289
    %v1421 = vmul.f32 %v1193, %v1289
    %v1422 = vmul.f32 %v1200, %v1293
    %v1423 = vmul.f32 %v1204, %v1293
    %v1424 = vmul.f32 %v1211, %v1297
    %v1425 = vmul.f32 %v1215, %v1297
    %v1426 = vadd.f32 %v1394, %v1410
    %v1427 = vadd.f32 %v1395, %v1411
    %v1428 = vadd.f32 %v1396, %v1412
    %v1429 = vadd.f32 %v1397, %v1413
    %v1430 = vadd.f32 %v1398, %v1414
    %v1431 = vadd.f32 %v1399, %v1415
    %v1432 = vadd.f32 %v1400, %v1416
    %v1433 = vadd.f32 %v1401, %v1417
    %v1434 = vadd.f32 %v1402, %v1418
    %v1435 = vadd.f32 %v1403, %v1419
    %v1436 = vadd.f32 %v1404, %v1420
    %v1437 = vadd.f32 %v1405, %v1421
    %v1438 = vadd.f32 %v1406, %v1422
    %v1439 = vadd.f32 %v1407, %v1423
    %v1440 = vadd.f32 %v1408, %v1424
    %v1441 = vadd.f32 %v1409, %v1425
    %v1442 = vmul.f32 %v1378, %v942
    %v1443 = vmul.f32 %v1379, %v943
    %v1444 = vmul.f32 %v1380, %v944
    %v1445 = vmul.f32 %v1381, %v945
    %v1446 = vmul.f32 %v1382, %v946
    %v1447 = vmul.f32 %v1383, %v947
    %v1448 = vmul.f32 %v1384, %v948
    %v1449 = vmul.f32 %v1385, %v949
    %v1450 = vmul.f32 %v1386, %v950
    %v1451 = vmul.f32 %v1387, %v951
    %v1452 = vmul.f32 %v1388, %v952
    %v1453 = vmul.f32 %v1389, %v953
    %v1454 = vmul.f32 %v1390, %v954
    %v1455 = vmul.f32 %v1391, %v955
    %v1456 = vmul.f32 %v1392, %v956
    %v1457 = vmul.f32 %v1393, %v957
    %v1458 = vmul.f32 %v1426, %v974
    %v1459 = vmul.f32 %v1427, %v975
    %v1460 = vmul.f32 %v1428, %v976
    %v1461 = vmul.f32 %v1429, %v977
    %v1462 = vmul.f32 %v1430, %v978
    %v1463 = vmul.f32 %v1431, %v979
    %v1464 = vmul.f32 %v1432, %v980
    %v1465 = vmul.f32 %v1433, %v981
    %v1466 = vmul.f32 %v1434, %v982
    %v1467 = vmul.f32 %v1435, %v983
    %v1468 = vmul.f32 %v1436, %v984
    %v1469 = vmul.f32 %v1437, %v985
    %v1470 = vmul.f32 %v1438, %v986
    %v1471 = vmul.f32 %v1439, %v987
    %v1472 = vmul.f32 %v1440, %v988
    %v1473 = vmul.f32 %v1441, %v989
    %v1474 = vsub.f32 %v1442, %v1458
    %v1475 = vsub.f32 %v1443, %v1459
    %v1476 = vsub.f32 %v1444, %v1460
    %v1477 = vsub.f32 %v1445, %v1461
    %v1478 = vsub.f32 %v1446, %v1462
    %v1479 = vsub.f32 %v1447, %v1463
    %v1480 = vsub.f32 %v1448, %v1464
    %v1481 = vsub.f32 %v1449, %v1465
    %v1482 = vsub.f32 %v1450, %v1466
    %v1483 = vsub.f32 %v1451, %v1467
    %v1484 = vsub.f32 %v1452, %v1468
    %v1485 = vsub.f32 %v1453, %v1469
    %v1486 = vsub.f32 %v1454, %v1470
    %v1487 = vsub.f32 %v1455, %v1471
    %v1488 = vsub.f32 %v1456, %v1472
    %v1489 = vsub.f32 %v1457, %v1473
    %1490 = vst.msk [vmem:[#allocation8] sm:$0xff] %vm62, %v1474
    %1491 = vst.msk [vmem:[#allocation8 + $0x8] sm:$0xff] %vm62, %v1475
    %1492 = vst.msk [vmem:[#allocation8 + $0x10] sm:$0xff] %vm62, %v1476
    %1493 = vst.msk [vmem:[#allocation8 + $0x18] sm:$0xff] %vm62, %v1477
    %1494 = vst.msk [vmem:[#allocation8 + $0x20] sm:$0xff] %vm62, %v1478
    %1495 = vst.msk [vmem:[#allocation8 + $0x28] sm:$0xff] %vm62, %v1479
    %1496 = vst.msk [vmem:[#allocation8 + $0x30] sm:$0xff] %vm62, %v1480
    %1497 = vst.msk [vmem:[#allocation8 + $0x38] sm:$0xff] %vm62, %v1481
    %1498 = vst.msk [vmem:[#allocation8 + $0x40] sm:$0xff] %vm62, %v1482
    %1499 = vst.msk [vmem:[#allocation8 + $0x48] sm:$0xff] %vm62, %v1483
    %1500 = vst.msk [vmem:[#allocation8 + $0x50] sm:$0xff] %vm62, %v1484
    %1501 = vst.msk [vmem:[#allocation8 + $0x58] sm:$0xff] %vm62, %v1485
    %1502 = vst.msk [vmem:[#allocation8 + $0x60] sm:$0xff] %vm62, %v1486
    %1503 = vst.msk [vmem:[#allocation8 + $0x68] sm:$0xff] %vm62, %v1487
    %1504 = vst.msk [vmem:[#allocation8 + $0x70] sm:$0xff] %vm62, %v1488
    %1505 = vst.msk [vmem:[#allocation8 + $0x78] sm:$0xff] %vm62, %v1489
    %v1506 = vmul.f32 %v1378, %v974
    %v1507 = vmul.f32 %v1379, %v975
    %v1508 = vmul.f32 %v1380, %v976
    %v1509 = vmul.f32 %v1381, %v977
    %v1510 = vmul.f32 %v1382, %v978
    %v1511 = vmul.f32 %v1383, %v979
    %v1512 = vmul.f32 %v1384, %v980
    %v1513 = vmul.f32 %v1385, %v981
    %v1514 = vmul.f32 %v1386, %v982
    %v1515 = vmul.f32 %v1387, %v983
    %v1516 = vmul.f32 %v1388, %v984
    %v1517 = vmul.f32 %v1389, %v985
    %v1518 = vmul.f32 %v1390, %v986
    %v1519 = vmul.f32 %v1391, %v987
    %v1520 = vmul.f32 %v1392, %v988
    %v1521 = vmul.f32 %v1393, %v989
    %v1522 = vmul.f32 %v1426, %v942
    %v1523 = vmul.f32 %v1427, %v943
    %v1524 = vmul.f32 %v1428, %v944
    %v1525 = vmul.f32 %v1429, %v945
    %v1526 = vmul.f32 %v1430, %v946
    %v1527 = vmul.f32 %v1431, %v947
    %v1528 = vmul.f32 %v1432, %v948
    %v1529 = vmul.f32 %v1433, %v949
    %v1530 = vmul.f32 %v1434, %v950
    %v1531 = vmul.f32 %v1435, %v951
    %v1532 = vmul.f32 %v1436, %v952
    %v1533 = vmul.f32 %v1437, %v953
    %v1534 = vmul.f32 %v1438, %v954
    %v1535 = vmul.f32 %v1439, %v955
    %v1536 = vmul.f32 %v1440, %v956
    %v1537 = vmul.f32 %v1441, %v957
    %v1538 = vadd.f32 %v1506, %v1522
    %v1539 = vadd.f32 %v1507, %v1523
    %v1540 = vadd.f32 %v1508, %v1524
    %v1541 = vadd.f32 %v1509, %v1525
    %v1542 = vadd.f32 %v1510, %v1526
    %v1543 = vadd.f32 %v1511, %v1527
    %v1544 = vadd.f32 %v1512, %v1528
    %v1545 = vadd.f32 %v1513, %v1529
    %v1546 = vadd.f32 %v1514, %v1530
    %v1547 = vadd.f32 %v1515, %v1531
    %v1548 = vadd.f32 %v1516, %v1532
    %v1549 = vadd.f32 %v1517, %v1533
    %v1550 = vadd.f32 %v1518, %v1534
    %v1551 = vadd.f32 %v1519, %v1535
    %v1552 = vadd.f32 %v1520, %v1536
    %v1553 = vadd.f32 %v1521, %v1537
    %1554 = vst.msk [vmem:[#allocation9] sm:$0xff] %vm62, %v1538
    %1555 = vst.msk [vmem:[#allocation9 + $0x8] sm:$0xff] %vm62, %v1539
    %1556 = vst.msk [vmem:[#allocation9 + $0x10] sm:$0xff] %vm62, %v1540
    %1557 = vst.msk [vmem:[#allocation9 + $0x18] sm:$0xff] %vm62, %v1541
    %1558 = vst.msk [vmem:[#allocation9 + $0x20] sm:$0xff] %vm62, %v1542
    %1559 = vst.msk [vmem:[#allocation9 + $0x28] sm:$0xff] %vm62, %v1543
    %1560 = vst.msk [vmem:[#allocation9 + $0x30] sm:$0xff] %vm62, %v1544
    %1561 = vst.msk [vmem:[#allocation9 + $0x38] sm:$0xff] %vm62, %v1545
    %1562 = vst.msk [vmem:[#allocation9 + $0x40] sm:$0xff] %vm62, %v1546
    %1563 = vst.msk [vmem:[#allocation9 + $0x48] sm:$0xff] %vm62, %v1547
    %1564 = vst.msk [vmem:[#allocation9 + $0x50] sm:$0xff] %vm62, %v1548
    %1565 = vst.msk [vmem:[#allocation9 + $0x58] sm:$0xff] %vm62, %v1549
    %1566 = vst.msk [vmem:[#allocation9 + $0x60] sm:$0xff] %vm62, %v1550
    %1567 = vst.msk [vmem:[#allocation9 + $0x68] sm:$0xff] %vm62, %v1551
    %1568 = vst.msk [vmem:[#allocation9 + $0x70] sm:$0xff] %vm62, %v1552
    %1569 = vst.msk [vmem:[#allocation9 + $0x78] sm:$0xff] %vm62, %v1553
    // Predicated region
    $region26: #{tpu_custom_call.1} parent=1 // pred_check
      _
    $region27: #{tpu_custom_call.1} parent=1 // pred_check_branch
      %1571 = sbr.rel (0) target = $region29
    $region28: #{tpu_custom_call.1} parent=1 // pred_region
      %s1573 = ssub.s32 2048, 2048
      %1574 = vsyncadd [#allocation4], %s1573
      %s1575 = sshll.u32 [#allocation8], 4
      %s1576 = int_to_ptr.vmem [resolvable:$true] %s1575
      %1581 = dma.vmem_to_hbm [thread:$0]  %s1576, 2048, %s3, [#allocation4], 128, 128, 8
    $region29: #{tpu_custom_call.1} parent=1 // pred_fallthru
      _
    // Predicated region
    $region30: #{tpu_custom_call.1} parent=1 // pred_check
      _
    $region31: #{tpu_custom_call.1} parent=1 // pred_check_branch
      %1583 = sbr.rel (0) target = $region33
    $region32: #{tpu_custom_call.1} parent=1 // pred_region
      %s1585 = ssub.s32 2048, 2048
      %1586 = vsyncadd [#allocation10], %s1585
      %s1587 = sshll.u32 [#allocation9], 4
      %s1588 = int_to_ptr.vmem [resolvable:$true] %s1587
      %1593 = dma.vmem_to_hbm [thread:$0]  %s1588, 2048, %s4, [#allocation10], 128, 128, 8
    $region33: #{tpu_custom_call.1} parent=1 // pred_fallthru
      _
    // Predicated region
    $region34: #{tpu_custom_call.1} parent=1 // pred_check
      _
    $region35: #{tpu_custom_call.1} parent=1 // pred_check_branch
      %1595 = sbr.rel (0) target = $region37
    $region36: #{tpu_custom_call.1} parent=1 // pred_region
      %1596 = dma.done [#allocation4], 2048
    $region37: #{tpu_custom_call.1} parent=1 // pred_fallthru
      _
    // Predicated region
    $region38: #{tpu_custom_call.1} parent=1 // pred_check
      _
    $region39: #{tpu_custom_call.1} parent=1 // pred_check_branch
      %1598 = sbr.rel (0) target = $region41
    $region40: #{tpu_custom_call.1} parent=1 // pred_region
      %1599 = dma.done [#allocation10], 2048
    $region41: #{tpu_custom_call.1} parent=1 // pred_fallthru
      _
    %1600 = vsyncpa [#allocation3], 1
    %1601 = vsyncpa [#allocation6], 1
    %1602 = vsyncpa [#allocation4], 1
    %1603 = vsyncpa [#allocation10], 1

</llo_original>
